<compile_context>
chip_gen: v6e
topology: v6e:2x2x1
jax: 0.10.0
libtpu: 0.0.40
codegen_flags: <defaults>
</compile_context>

<pallas_src>
import jax
import jax.numpy as jnp
from jax.experimental import pallas as pl
from jax.experimental.pallas import tpu as pltpu

EPS = 1e-5            # nn.BatchNorm1d default eps
BATCH = 16            # module hard-codes feature.view(16, 1, 60, 60)
N_OUT = 60 * 60       # 3600
N_PAD = 4096          # 32 * 128: lane-dense, splits into 4 equal 128-multiple tiles
TILE_N = 1024         # grid = 4  ->  2 steps per TensorCore on v7x (even split)


def decoder_target_kernel(x_ref,
                          w1_ref, g1_ref, beta1_ref,
                          w2_ref, g2_ref, beta2_ref,
                          w3_ref, b3_ref,
                          out_ref):
    """One grid step: tiny f32 layer-1/2 prologue (recomputed per step so every
    step is independent -> safe to shard across TCs), then matmul h2 against
    this step's streamed (512, TILE_N) bf16 slice of w3, add bias, tanh."""
    x = x_ref[...]                                                  # (16, 32) f32

    # --- Linear(32,256) [bias cancelled by BN] + BatchNorm1d (batch stats) + ReLU
    h1 = jnp.dot(x, w1_ref[...], preferred_element_type=jnp.float32)   # (16,256)
    m1 = jnp.mean(h1, axis=0, keepdims=True)
    v1 = jnp.mean(h1 * h1, axis=0, keepdims=True) - m1 * m1            # fused 1-pass var
    h1 = (h1 - m1) * jax.lax.rsqrt(v1 + EPS) * g1_ref[...] + beta1_ref[...]
    h1 = jnp.maximum(h1, 0.0)

    # --- Linear(256,512) [bias cancelled by BN] + BatchNorm1d + ReLU
    h2 = jnp.dot(h1, w2_ref[...], preferred_element_type=jnp.float32)  # (16,512)
    m2 = jnp.mean(h2, axis=0, keepdims=True)
    v2 = jnp.mean(h2 * h2, axis=0, keepdims=True) - m2 * m2
    h2 = (h2 - m2) * jax.lax.rsqrt(v2 + EPS) * g2_ref[...] + beta2_ref[...]
    h2 = jnp.maximum(h2, 0.0)

    # --- Linear(512, 3600->4096) tile (bf16 streamed weight) + Tanh
    h3 = jnp.dot(h2.astype(jnp.bfloat16), w3_ref[...],
                 preferred_element_type=jnp.float32) + b3_ref[...]
    out_ref[...] = jnp.tanh(h3)                                        # (16, TILE_N)


def prepare_params(params):
    """One-time parameter prep (do this at model init, NOT per forward call):
    pad w3/b3 columns 3600 -> 4096 and cast w3 to bf16 for streaming.
    Returns the kernel-ready parameter tuple."""
    (w1, b1, g1, beta1, w2, b2, g2, beta2, w3, b3) = params
    del b1, b2  # cancelled exactly by BN's batch-mean subtraction (train mode)
    w3p = jnp.zeros((512, N_PAD), jnp.bfloat16).at[:, :N_OUT].set(
        w3.astype(jnp.bfloat16))
    b3p = jnp.zeros((1, N_PAD), jnp.float32).at[:, :N_OUT].set(
        b3.reshape(1, N_OUT))
    return (w1, g1, beta1, w2, g2, beta2, w3p, b3p)


@jax.jit
def decoder_target(x, prepped_params):
    """x: (16, 32) f32, prepped_params from prepare_params().
    Returns (16, 1, 60, 60) f32 (NCHW)."""
    (w1, g1, beta1, w2, g2, beta2, w3p, b3p) = prepped_params

    feat = pl.pallas_call(
        decoder_target_kernel,
        out_shape=jax.ShapeDtypeStruct((BATCH, N_PAD), jnp.float32),
        grid=(N_PAD // TILE_N,),                           # 4 steps
        in_specs=[
            pl.BlockSpec((BATCH, 32), lambda j: (0, 0)),   # x (resident)
            pl.BlockSpec((32, 256), lambda j: (0, 0)),     # w1 f32 (resident)
            pl.BlockSpec((1, 256), lambda j: (0, 0)),      # gamma1
            pl.BlockSpec((1, 256), lambda j: (0, 0)),      # beta1
            pl.BlockSpec((256, 512), lambda j: (0, 0)),    # w2 f32 (resident)
            pl.BlockSpec((1, 512), lambda j: (0, 0)),      # gamma2
            pl.BlockSpec((1, 512), lambda j: (0, 0)),      # beta2
            pl.BlockSpec((512, TILE_N), lambda j: (0, j)), # w3 bf16 tile (streamed)
            pl.BlockSpec((1, TILE_N), lambda j: (0, j)),   # b3 tile
        ],
        out_specs=pl.BlockSpec((BATCH, TILE_N), lambda j: (0, j)),
        compiler_params=pltpu.CompilerParams(
            dimension_semantics=("parallel",),   # shard w3 tiles across v7x TCs
            vmem_limit_bytes=16 * 1024 * 1024,   # ~4 MiB actually needed; v5e default
        ),
        cost_estimate=pl.CostEstimate(
            flops=71_000_000,          # ~2*(16*32*256 + 16*256*512 + 16*512*4096)
            transcendentals=66_000,    # tanh on 16*4096 + rsqrt
            bytes_accessed=5_000_000,  # bf16 w3 + f32 w1/w2/activations/output
        ),
    )(x, w1, g1, beta1, w2, g2, beta2, w3p, b3p)

    # Drop padding, then PyTorch's feature.view(16, 1, 60, 60).
    return feat[:, :N_OUT].reshape(BATCH, 1, 60, 60)


def decoder_target_reference(x, params):
    """Pure-JAX f32 reference matching the PyTorch module in train mode."""
    (w1, b1, g1, beta1, w2, b2, g2, beta2, w3, b3) = params
    h = x @ w1 + b1
    m = h.mean(0, keepdims=True)
    v = ((h - m) ** 2).mean(0, keepdims=True)
    h = jnp.maximum((h - m) / jnp.sqrt(v + EPS) * g1 + beta1, 0.0)
    h = h @ w2 + b2
    m = h.mean(0, keepdims=True)
    v = ((h - m) ** 2).mean(0, keepdims=True)
    h = jnp.maximum((h - m) / jnp.sqrt(v + EPS) * g2 + beta2, 0.0)
    h = jnp.tanh(h @ w3 + b3)
    return h.reshape(BATCH, 1, 60, 60)


def init_params(key):
    """Deterministic synthetic parameters with the module's shapes.
    Linear weights stored transposed (in_features, out_features) so the kernel
    does x @ W; biases / BN params kept 2D (1, N) for TPU-friendly layout."""
    ks = jax.random.split(key, 8)

    def lin(k, fan_in, fan_out):
        bound = 1.0 / jnp.sqrt(fan_in)
        kw, kb = jax.random.split(k)
        w = jax.random.uniform(kw, (fan_in, fan_out), jnp.float32, -bound, bound)
        b = jax.random.uniform(kb, (1, fan_out), jnp.float32, -bound, bound)
        return w, b

    w1, b1 = lin(ks[0], 32, 256)
    w2, b2 = lin(ks[1], 256, 512)
    w3, b3 = lin(ks[2], 512, N_OUT)
    # BatchNorm affine params (PyTorch default gamma=1, beta=0) with a small
    # perturbation so they are not trivially identity.
    g1 = jnp.ones((1, 256), jnp.float32) + 0.01 * jax.random.normal(ks[3], (1, 256))
    beta1 = 0.01 * jax.random.normal(ks[4], (1, 256)).astype(jnp.float32)
    g2 = jnp.ones((1, 512), jnp.float32) + 0.01 * jax.random.normal(ks[5], (1, 512))
    beta2 = 0.01 * jax.random.normal(ks[6], (1, 512)).astype(jnp.float32)
    return (w1, b1, g1, beta1, w2, b2, g2, beta2, w3, b3)


if __name__ == "__main__":
    key = jax.random.PRNGKey(0)
    k_in, k_params = jax.random.split(key)
    # Batch must be 16: the module hard-codes feature.view(16, 1, 60, 60).
    x = jax.random.normal(k_in, (BATCH, 32), dtype=jnp.float32)
    params = init_params(k_params)

    # One-time weight prep (hoisted out of the per-call path).
    prepped = jax.block_until_ready(prepare_params(params))

    out = decoder_target(x, prepped)
    out = jax.block_until_ready(out)

    assert out.shape == (BATCH, 1, 60, 60), out.shape
    assert out.dtype == jnp.float32
    assert bool(jnp.all(jnp.isfinite(out)))

    ref = decoder_target_reference(x, params)
    # Only w3 / h2-operand are bf16; tanh output error stays well below 5e-2.
    assert bool(jnp.allclose(out, ref, atol=5e-2, rtol=0.0)), (
        float(jnp.max(jnp.abs(out - ref))))

    print("KERNEL_OK")
</pallas_src>

<mosaic_0001>
module attributes {stable_mosaic.version = 11 : i64} {
  func.func @decoder_target_kernel(%arg0: i32, %arg1: memref<16x32xf32, #tpu.memory_space<vmem>>, %arg2: memref<32x256xf32, #tpu.memory_space<vmem>>, %arg3: memref<1x256xf32, #tpu.memory_space<vmem>>, %arg4: memref<1x256xf32, #tpu.memory_space<vmem>>, %arg5: memref<256x512xf32, #tpu.memory_space<vmem>>, %arg6: memref<1x512xf32, #tpu.memory_space<vmem>>, %arg7: memref<1x512xf32, #tpu.memory_space<vmem>>, %arg8: memref<512x1024xbf16, #tpu.memory_space<vmem>>, %arg9: memref<1x1024xf32, #tpu.memory_space<vmem>>, %arg10: memref<16x1024xf32, #tpu.memory_space<vmem>>) attributes {dimension_semantics = [#tpu.dimension_semantics<parallel>], iteration_bounds = array<i64: 4>, scalar_prefetch = 0 : i64, scratch_operands = 0 : i64, tpu.core_type = #tpu.core_type<tc>, window_params = [{pipeline_mode = #tpu.pipeline_mode<synchronous>, transform_indices = @transform_0, window_bounds = array<i64: 16, 32>}, {pipeline_mode = #tpu.pipeline_mode<synchronous>, transform_indices = @transform_1, window_bounds = array<i64: 32, 256>}, {pipeline_mode = #tpu.pipeline_mode<synchronous>, transform_indices = @transform_2, window_bounds = array<i64: 1, 256>}, {pipeline_mode = #tpu.pipeline_mode<synchronous>, transform_indices = @transform_3, window_bounds = array<i64: 1, 256>}, {pipeline_mode = #tpu.pipeline_mode<synchronous>, transform_indices = @transform_4, window_bounds = array<i64: 256, 512>}, {pipeline_mode = #tpu.pipeline_mode<synchronous>, transform_indices = @transform_5, window_bounds = array<i64: 1, 512>}, {pipeline_mode = #tpu.pipeline_mode<synchronous>, transform_indices = @transform_6, window_bounds = array<i64: 1, 512>}, {transform_indices = @transform_7, window_bounds = array<i64: 512, 1024>}, {transform_indices = @transform_8, window_bounds = array<i64: 1, 1024>}, {transform_indices = @transform_9, window_bounds = array<i64: 16, 1024>}]} {
    %c0 = arith.constant 0 : index
    %c0_0 = arith.constant 0 : index
    %0 = vector.load %arg1[%c0, %c0_0] : memref<16x32xf32, #tpu.memory_space<vmem>>, vector<16x32xf32>
    %c0_1 = arith.constant 0 : index
    %c0_2 = arith.constant 0 : index
    %1 = vector.load %arg2[%c0_1, %c0_2] : memref<32x256xf32, #tpu.memory_space<vmem>>, vector<32x256xf32>
    %cst = arith.constant dense<0.000000e+00> : vector<16x256xf32>
    %2 = tpu.matmul %0, %1, %cst {dimension_numbers = #tpu.dot_dimension_numbers<[1], [0], [0], [1], [0, 0, 1, 1], [], []>} : vector<16x32xf32>, vector<32x256xf32>, vector<16x256xf32> -> vector<16x256xf32>
    %cst_3 = arith.constant dense<0.000000e+00> : vector<256xf32>
    %3 = vector.multi_reduction <add>, %2, %cst_3 [0] : vector<16x256xf32> to vector<256xf32>
    %4 = vector.shape_cast %3 : vector<256xf32> to vector<1x256xf32>
    %cst_4 = arith.constant 1.600000e+01 : f32
    %5 = vector.broadcast %cst_4 : f32 to vector<1x256xf32>
    %6 = arith.divf %4, %5 : vector<1x256xf32>
    %7 = arith.mulf %2, %2 : vector<16x256xf32>
    %cst_5 = arith.constant dense<0.000000e+00> : vector<256xf32>
    %8 = vector.multi_reduction <add>, %7, %cst_5 [0] : vector<16x256xf32> to vector<256xf32>
    %9 = vector.shape_cast %8 : vector<256xf32> to vector<1x256xf32>
    %cst_6 = arith.constant 1.600000e+01 : f32
    %10 = vector.broadcast %cst_6 : f32 to vector<1x256xf32>
    %11 = arith.divf %9, %10 : vector<1x256xf32>
    %12 = arith.mulf %6, %6 : vector<1x256xf32>
    %13 = arith.subf %11, %12 : vector<1x256xf32>
    %14 = vector.broadcast %6 : vector<1x256xf32> to vector<16x256xf32>
    %15 = arith.subf %2, %14 : vector<16x256xf32>
    %cst_7 = arith.constant 9.99999974E-6 : f32
    %16 = vector.broadcast %cst_7 : f32 to vector<1x256xf32>
    %17 = arith.addf %13, %16 : vector<1x256xf32>
    %18 = math.rsqrt %17 : vector<1x256xf32>
    %19 = vector.broadcast %18 : vector<1x256xf32> to vector<16x256xf32>
    %20 = arith.mulf %15, %19 : vector<16x256xf32>
    %c0_8 = arith.constant 0 : index
    %c0_9 = arith.constant 0 : index
    %21 = vector.load %arg3[%c0_8, %c0_9] : memref<1x256xf32, #tpu.memory_space<vmem>>, vector<1x256xf32>
    %22 = vector.broadcast %21 : vector<1x256xf32> to vector<16x256xf32>
    %23 = arith.mulf %20, %22 : vector<16x256xf32>
    %c0_10 = arith.constant 0 : index
    %c0_11 = arith.constant 0 : index
    %24 = vector.load %arg4[%c0_10, %c0_11] : memref<1x256xf32, #tpu.memory_space<vmem>>, vector<1x256xf32>
    %25 = vector.broadcast %24 : vector<1x256xf32> to vector<16x256xf32>
    %26 = arith.addf %23, %25 : vector<16x256xf32>
    %cst_12 = arith.constant 0.000000e+00 : f32
    %27 = vector.broadcast %cst_12 : f32 to vector<16x256xf32>
    %28 = arith.maximumf %26, %27 : vector<16x256xf32>
    %c0_13 = arith.constant 0 : index
    %c0_14 = arith.constant 0 : index
    %29 = vector.load %arg5[%c0_13, %c0_14] : memref<256x512xf32, #tpu.memory_space<vmem>>, vector<256x512xf32>
    %cst_15 = arith.constant dense<0.000000e+00> : vector<16x512xf32>
    %30 = tpu.matmul %28, %29, %cst_15 {dimension_numbers = #tpu.dot_dimension_numbers<[1], [0], [0], [1], [0, 0, 1, 1], [], []>} : vector<16x256xf32>, vector<256x512xf32>, vector<16x512xf32> -> vector<16x512xf32>
    %cst_16 = arith.constant dense<0.000000e+00> : vector<512xf32>
    %31 = vector.multi_reduction <add>, %30, %cst_16 [0] : vector<16x512xf32> to vector<512xf32>
    %32 = vector.shape_cast %31 : vector<512xf32> to vector<1x512xf32>
    %cst_17 = arith.constant 1.600000e+01 : f32
    %33 = vector.broadcast %cst_17 : f32 to vector<1x512xf32>
    %34 = arith.divf %32, %33 : vector<1x512xf32>
    %35 = arith.mulf %30, %30 : vector<16x512xf32>
    %cst_18 = arith.constant dense<0.000000e+00> : vector<512xf32>
    %36 = vector.multi_reduction <add>, %35, %cst_18 [0] : vector<16x512xf32> to vector<512xf32>
    %37 = vector.shape_cast %36 : vector<512xf32> to vector<1x512xf32>
    %cst_19 = arith.constant 1.600000e+01 : f32
    %38 = vector.broadcast %cst_19 : f32 to vector<1x512xf32>
    %39 = arith.divf %37, %38 : vector<1x512xf32>
    %40 = arith.mulf %34, %34 : vector<1x512xf32>
    %41 = arith.subf %39, %40 : vector<1x512xf32>
    %42 = vector.broadcast %34 : vector<1x512xf32> to vector<16x512xf32>
    %43 = arith.subf %30, %42 : vector<16x512xf32>
    %cst_20 = arith.constant 9.99999974E-6 : f32
    %44 = vector.broadcast %cst_20 : f32 to vector<1x512xf32>
    %45 = arith.addf %41, %44 : vector<1x512xf32>
    %46 = math.rsqrt %45 : vector<1x512xf32>
    %47 = vector.broadcast %46 : vector<1x512xf32> to vector<16x512xf32>
    %48 = arith.mulf %43, %47 : vector<16x512xf32>
    %c0_21 = arith.constant 0 : index
    %c0_22 = arith.constant 0 : index
    %49 = vector.load %arg6[%c0_21, %c0_22] : memref<1x512xf32, #tpu.memory_space<vmem>>, vector<1x512xf32>
    %50 = vector.broadcast %49 : vector<1x512xf32> to vector<16x512xf32>
    %51 = arith.mulf %48, %50 : vector<16x512xf32>
    %c0_23 = arith.constant 0 : index
    %c0_24 = arith.constant 0 : index
    %52 = vector.load %arg7[%c0_23, %c0_24] : memref<1x512xf32, #tpu.memory_space<vmem>>, vector<1x512xf32>
    %53 = vector.broadcast %52 : vector<1x512xf32> to vector<16x512xf32>
    %54 = arith.addf %51, %53 : vector<16x512xf32>
    %cst_25 = arith.constant 0.000000e+00 : f32
    %55 = vector.broadcast %cst_25 : f32 to vector<16x512xf32>
    %56 = arith.maximumf %54, %55 : vector<16x512xf32>
    %57 = arith.truncf %56 : vector<16x512xf32> to vector<16x512xbf16>
    %c0_26 = arith.constant 0 : index
    %c0_27 = arith.constant 0 : index
    %58 = vector.load %arg8[%c0_26, %c0_27] : memref<512x1024xbf16, #tpu.memory_space<vmem>>, vector<512x1024xbf16>
    %cst_28 = arith.constant dense<0.000000e+00> : vector<16x1024xf32>
    %59 = tpu.matmul %57, %58, %cst_28 {dimension_numbers = #tpu.dot_dimension_numbers<[1], [0], [0], [1], [0, 0, 1, 1], [], []>} : vector<16x512xbf16>, vector<512x1024xbf16>, vector<16x1024xf32> -> vector<16x1024xf32>
    %c0_29 = arith.constant 0 : index
    %c0_30 = arith.constant 0 : index
    %60 = vector.load %arg9[%c0_29, %c0_30] : memref<1x1024xf32, #tpu.memory_space<vmem>>, vector<1x1024xf32>
    %61 = vector.broadcast %60 : vector<1x1024xf32> to vector<16x1024xf32>
    %62 = arith.addf %59, %61 : vector<16x1024xf32>
    %63 = math.tanh %62 : vector<16x1024xf32>
    %c0_31 = arith.constant 0 : index
    %c0_32 = arith.constant 0 : index
    %64 = vector.load %arg10[%c0_31, %c0_32] : memref<16x1024xf32, #tpu.memory_space<vmem>>, vector<16x1024xf32>
    tpu.vector_store %arg10[%c0_31, %c0_32], %63 {strides = array<i32>} : memref<16x1024xf32, #tpu.memory_space<vmem>>, vector<16x1024xf32>,
    return
  }
  func.func @transform_0(%arg0: i32) -> (i32, i32) {
    %c0_i32 = arith.constant 0 : i32
    %c0_i32_0 = arith.constant 0 : i32
    %c0_i32_1 = arith.constant 0 : i32
    return %c0_i32, %c0_i32_0 : i32, i32
  }
  func.func @transform_1(%arg0: i32) -> (i32, i32) {
    %c0_i32 = arith.constant 0 : i32
    %c0_i32_0 = arith.constant 0 : i32
    %c0_i32_1 = arith.constant 0 : i32
    return %c0_i32, %c0_i32_0 : i32, i32
  }
  func.func @transform_2(%arg0: i32) -> (i32, i32) {
    %c0_i32 = arith.constant 0 : i32
    %c0_i32_0 = arith.constant 0 : i32
    %c0_i32_1 = arith.constant 0 : i32
    return %c0_i32, %c0_i32_0 : i32, i32
  }
  func.func @transform_3(%arg0: i32) -> (i32, i32) {
    %c0_i32 = arith.constant 0 : i32
    %c0_i32_0 = arith.constant 0 : i32
    %c0_i32_1 = arith.constant 0 : i32
    return %c0_i32, %c0_i32_0 : i32, i32
  }
  func.func @transform_4(%arg0: i32) -> (i32, i32) {
    %c0_i32 = arith.constant 0 : i32
    %c0_i32_0 = arith.constant 0 : i32
    %c0_i32_1 = arith.constant 0 : i32
    return %c0_i32, %c0_i32_0 : i32, i32
  }
  func.func @transform_5(%arg0: i32) -> (i32, i32) {
    %c0_i32 = arith.constant 0 : i32
    %c0_i32_0 = arith.constant 0 : i32
    %c0_i32_1 = arith.constant 0 : i32
    return %c0_i32, %c0_i32_0 : i32, i32
  }
  func.func @transform_6(%arg0: i32) -> (i32, i32) {
    %c0_i32 = arith.constant 0 : i32
    %c0_i32_0 = arith.constant 0 : i32
    %c0_i32_1 = arith.constant 0 : i32
    return %c0_i32, %c0_i32_0 : i32, i32
  }
  func.func @transform_7(%arg0: i32) -> (i32, i32) {
    %c0_i32 = arith.constant 0 : i32
    %c0_i32_0 = arith.constant 0 : i32
    return %c0_i32, %arg0 : i32, i32
  }
  func.func @transform_8(%arg0: i32) -> (i32, i32) {
    %c0_i32 = arith.constant 0 : i32
    %c0_i32_0 = arith.constant 0 : i32
    return %c0_i32, %arg0 : i32, i32
  }
  func.func @transform_9(%arg0: i32) -> (i32, i32) {
    %c0_i32 = arith.constant 0 : i32
    %c0_i32_0 = arith.constant 0 : i32
    return %c0_i32, %arg0 : i32, i32
  }
}

</mosaic_0001>

<llo_original>
// kernel: decoder_target.1
$region0: #{decoder_target.1}
  #allocation0 [shape = 'u32[]', space=smem, size = 0x4, offset = 0x4, fixed_abs, tag = 'smem constant byte address 0x4 - core index']
  #allocation1 [shape = 'u32[144,128]{1,0:T(1,128)}', space=vmem, size = 0x12000, scoped, tag = 'internal scratch']
  %s0 = inlined_call_operand.hbm [shape: f32[16,32], index: 0, kind: input, shape index: {}]
  %s1 = inlined_call_operand.hbm [shape: f32[32,256], index: 1, kind: input, shape index: {}]
  %s2 = inlined_call_operand.hbm [shape: f32[1,256], index: 2, kind: input, shape index: {}]
  %s3 = inlined_call_operand.hbm [shape: f32[1,256], index: 3, kind: input, shape index: {}]
  %s4 = inlined_call_operand.hbm [shape: f32[256,512], index: 4, kind: input, shape index: {}]
  %s5 = inlined_call_operand.hbm [shape: f32[1,512], index: 5, kind: input, shape index: {}]
  %s6 = inlined_call_operand.hbm [shape: f32[1,512], index: 6, kind: input, shape index: {}]
  %s7 = inlined_call_operand.hbm [shape: bf16[512,4096], index: 7, kind: input, shape index: {}]
  %s8 = inlined_call_operand.hbm [shape: f32[1,4096], index: 8, kind: input, shape index: {}]
  %s9 = inlined_call_operand.vmem [shape: f32[16,4096], index: 9, kind: output, shape index: {}]
  %s10 = sld [smem:[#allocation0]]
  $region124: #{decoder_target.1} parent=0
    _
  %s12 = ssub.s32 1, %s10
  %s13 = scalar_select 0, %s12, %s10
  $region1: #{decoder_target.1} parent=0
    #allocation2 [shape = 'u8[8192]{0}', space=vmem, size = 0x2000, scoped, tag = 'input window, operand 0, single buffered']
    #allocation3 [shape = 's32[2]{0}', space=sflag, size = 0x8, scoped, tag = 'scoped memory for decoder_target.1']
    #allocation4 [shape = 'u8[32768]{0}', space=vmem, size = 0x8000, scoped, tag = 'input window, operand 1, single buffered']
    #allocation5 [shape = 's32[1]{0}', space=sflag, size = 0x4, scoped, tag = 'scoped memory for decoder_target.1']
    #allocation6 [shape = 'u8[1024]{0}', space=vmem, size = 0x400, scoped, tag = 'input window, operand 2, single buffered']
    #allocation7 [shape = 'u8[1024]{0}', space=vmem, size = 0x400, scoped, tag = 'input window, operand 3, single buffered']
    #allocation8 [shape = 's32[1]{0}', space=sflag, size = 0x4, scoped, tag = 'scoped memory for decoder_target.1']
    #allocation9 [shape = 'u8[524288]{0}', space=vmem, size = 0x80000, scoped, tag = 'input window, operand 4, single buffered']
    #allocation10 [shape = 'u8[2048]{0}', space=vmem, size = 0x800, scoped, tag = 'input window, operand 5, single buffered']
    #allocation11 [shape = 's32[1]{0}', space=sflag, size = 0x4, scoped, tag = 'scoped memory for decoder_target.1']
    #allocation12 [shape = 'u8[2048]{0}', space=vmem, size = 0x800, scoped, tag = 'input window, operand 6, single buffered']
    #allocation13 [shape = 'u8[2097152]{0}', space=vmem, size = 0x200000, scoped, tag = 'input window, operand 7']
    #allocation14 [shape = 's32[2]{0}', space=sflag, size = 0x8, scoped, tag = 'scoped memory for decoder_target.1']
    #allocation15 [shape = 'u8[8192]{0}', space=vmem, size = 0x2000, scoped, tag = 'input window, operand 8']
    #allocation16 [shape = 'u8[131072]{0}', space=vmem, size = 0x20000, scoped, tag = 'output window, operand 0']
    %14 = vsyncpa [#allocation3], 0
    %15 = vsyncpa [#allocation5], 0
    %16 = vsyncpa [#allocation8], 0
    %17 = vsyncpa [#allocation11], 0
    %18 = vsyncpa [#allocation14], 0
    %s19 = scalar_lea.sflag [#allocation14], 1
    %20 = vsyncpa %s19, 0
    loop: start=0, step=1, limit=6
    $region2: #{decoder_target.1} parent=1 // loop_pre_header
      _
    $region3: #{decoder_target.1} parent=1 // loop_header
      %s22 = sphi 0, %s26
      %p23 = scmp.ge.s32.totalorder %s22, 6
      %s30 = sphi 0, %s30
      %s32 = sphi 0, %s30
      %s33 = sphi 0, %s32
      %s47 = sphi 0, %s33
      %s51 = sphi 0, %s51
      %s53 = sphi 0, %s51
      %s54 = sphi 0, %s53
      %s68 = sphi 0, %s54
      %s72 = sphi 0, %s72
      %s74 = sphi 0, %s72
      %s75 = sphi 0, %s74
      %s89 = sphi 0, %s75
      %s93 = sphi 0, %s93
      %s95 = sphi 0, %s93
      %s96 = sphi 0, %s95
      %s110 = sphi 0, %s96
      %s114 = sphi 0, %s114
      %s116 = sphi 0, %s114
      %s117 = sphi 0, %s116
      %s131 = sphi 0, %s117
      %s135 = sphi 0, %s135
      %s137 = sphi 0, %s135
      %s138 = sphi 0, %s137
      %s152 = sphi 0, %s138
      %s156 = sphi 0, %s156
      %s158 = sphi 0, %s156
      %s159 = sphi 0, %s158
      %s173 = sphi 0, %s159
      %s179 = sphi 0, %s181
      %s182 = sphi 0, %s179
      %s183 = sphi 0, %s182
      %s199 = sphi 0, %s183
      %s205 = sphi 0, %s207
      %s208 = sphi 0, %s205
      %s209 = sphi 0, %s208
      %s225 = sphi 0, %s209
      %s231 = sphi 0, %s233
      %s234 = sphi 0, %s231
      %s235 = sphi 0, %s234
      %s251 = sphi 0, %s235
    $region4: #{decoder_target.1} parent=1 // loop_header_branch
      %25 = sbr.rel (%p23) target = $region8
    $region5: #{decoder_target.1} parent=1 // loop_body
      %s27 = ssub.s32 %s22, 1
      %s28 = ssub.s32 %s22, 2
      %s29 = sadd.s32 %s22, 1
      %s31 = sadd.s32 %s30, 1
      %p34 = scmp.eq.s32.totalorder %s22, 3
      %p35 = scmp.ne.s32.totalorder %s30, %s32
      %p36 = scmp.eq.s32.totalorder %s22, 0
      %p37 = por %p35, %p36
      %p38 = scmp.ne.s32.totalorder %s30, %s32
      %p39 = scmp.eq.s32.totalorder %s27, 3
      %p40 = por %p38, %p39
      %p41 = scmp.ne.s32.totalorder %s32, %s33
      %p42 = scmp.eq.s32.totalorder %s27, 0
      %p43 = por %p41, %p42
      %p44 = scmp.ne.s32.totalorder %s32, %s33
      %p45 = scmp.eq.s32.totalorder %s28, 3
      %p46 = por %p44, %p45
      %p48 = scmp.ne.s32.totalorder %s33, %s47
      %p49 = scmp.eq.s32.totalorder %s28, 0
      %p50 = por %p48, %p49
      %s52 = sadd.s32 %s51, 1
      %p55 = scmp.eq.s32.totalorder %s22, 3
      %p56 = scmp.ne.s32.totalorder %s51, %s53
      %p57 = scmp.eq.s32.totalorder %s22, 0
      %p58 = por %p56, %p57
      %p59 = scmp.ne.s32.totalorder %s51, %s53
      %p60 = scmp.eq.s32.totalorder %s27, 3
      %p61 = por %p59, %p60
      %p62 = scmp.ne.s32.totalorder %s53, %s54
      %p63 = scmp.eq.s32.totalorder %s27, 0
      %p64 = por %p62, %p63
      %p65 = scmp.ne.s32.totalorder %s53, %s54
      %p66 = scmp.eq.s32.totalorder %s28, 3
      %p67 = por %p65, %p66
      %p69 = scmp.ne.s32.totalorder %s54, %s68
      %p70 = scmp.eq.s32.totalorder %s28, 0
      %p71 = por %p69, %p70
      %s73 = sadd.s32 %s72, 1
      %p76 = scmp.eq.s32.totalorder %s22, 3
      %p77 = scmp.ne.s32.totalorder %s72, %s74
      %p78 = scmp.eq.s32.totalorder %s22, 0
      %p79 = por %p77, %p78
      %p80 = scmp.ne.s32.totalorder %s72, %s74
      %p81 = scmp.eq.s32.totalorder %s27, 3
      %p82 = por %p80, %p81
      %p83 = scmp.ne.s32.totalorder %s74, %s75
      %p84 = scmp.eq.s32.totalorder %s27, 0
      %p85 = por %p83, %p84
      %p86 = scmp.ne.s32.totalorder %s74, %s75
      %p87 = scmp.eq.s32.totalorder %s28, 3
      %p88 = por %p86, %p87
      %p90 = scmp.ne.s32.totalorder %s75, %s89
      %p91 = scmp.eq.s32.totalorder %s28, 0
      %p92 = por %p90, %p91
      %s94 = sadd.s32 %s93, 1
      %p97 = scmp.eq.s32.totalorder %s22, 3
      %p98 = scmp.ne.s32.totalorder %s93, %s95
      %p99 = scmp.eq.s32.totalorder %s22, 0
      %p100 = por %p98, %p99
      %p101 = scmp.ne.s32.totalorder %s93, %s95
      %p102 = scmp.eq.s32.totalorder %s27, 3
      %p103 = por %p101, %p102
      %p104 = scmp.ne.s32.totalorder %s95, %s96
      %p105 = scmp.eq.s32.totalorder %s27, 0
      %p106 = por %p104, %p105
      %p107 = scmp.ne.s32.totalorder %s95, %s96
      %p108 = scmp.eq.s32.totalorder %s28, 3
      %p109 = por %p107, %p108
      %p111 = scmp.ne.s32.totalorder %s96, %s110
      %p112 = scmp.eq.s32.totalorder %s28, 0
      %p113 = por %p111, %p112
      %s115 = sadd.s32 %s114, 1
      %p118 = scmp.eq.s32.totalorder %s22, 3
      %p119 = scmp.ne.s32.totalorder %s114, %s116
      %p120 = scmp.eq.s32.totalorder %s22, 0
      %p121 = por %p119, %p120
      %p122 = scmp.ne.s32.totalorder %s114, %s116
      %p123 = scmp.eq.s32.totalorder %s27, 3
      %p124 = por %p122, %p123
      %p125 = scmp.ne.s32.totalorder %s116, %s117
      %p126 = scmp.eq.s32.totalorder %s27, 0
      %p127 = por %p125, %p126
      %p128 = scmp.ne.s32.totalorder %s116, %s117
      %p129 = scmp.eq.s32.totalorder %s28, 3
      %p130 = por %p128, %p129
      %p132 = scmp.ne.s32.totalorder %s117, %s131
      %p133 = scmp.eq.s32.totalorder %s28, 0
      %p134 = por %p132, %p133
      %s136 = sadd.s32 %s135, 1
      %p139 = scmp.eq.s32.totalorder %s22, 3
      %p140 = scmp.ne.s32.totalorder %s135, %s137
      %p141 = scmp.eq.s32.totalorder %s22, 0
      %p142 = por %p140, %p141
      %p143 = scmp.ne.s32.totalorder %s135, %s137
      %p144 = scmp.eq.s32.totalorder %s27, 3
      %p145 = por %p143, %p144
      %p146 = scmp.ne.s32.totalorder %s137, %s138
      %p147 = scmp.eq.s32.totalorder %s27, 0
      %p148 = por %p146, %p147
      %p149 = scmp.ne.s32.totalorder %s137, %s138
      %p150 = scmp.eq.s32.totalorder %s28, 3
      %p151 = por %p149, %p150
      %p153 = scmp.ne.s32.totalorder %s138, %s152
      %p154 = scmp.eq.s32.totalorder %s28, 0
      %p155 = por %p153, %p154
      %s157 = sadd.s32 %s156, 1
      %p160 = scmp.eq.s32.totalorder %s22, 3
      %p161 = scmp.ne.s32.totalorder %s156, %s158
      %p162 = scmp.eq.s32.totalorder %s22, 0
      %p163 = por %p161, %p162
      %p164 = scmp.ne.s32.totalorder %s156, %s158
      %p165 = scmp.eq.s32.totalorder %s27, 3
      %p166 = por %p164, %p165
      %p167 = scmp.ne.s32.totalorder %s158, %s159
      %p168 = scmp.eq.s32.totalorder %s27, 0
      %p169 = por %p167, %p168
      %p170 = scmp.ne.s32.totalorder %s158, %s159
      %p171 = scmp.eq.s32.totalorder %s28, 3
      %p172 = por %p170, %p171
      %p174 = scmp.ne.s32.totalorder %s159, %s173
      %p175 = scmp.eq.s32.totalorder %s28, 0
      %p176 = por %p174, %p175
      %s177 = ssub.s32 %s22, %s29
      %p178 = scmp.eq.s32.totalorder %s177, 0
      %s180 = sadd.s32 %s179, 1
      %s181 = scalar_select %p178, %s179, %s180
      %p184 = pneg %p178
      %p185 = scmp.eq.s32.totalorder %s22, 3
      %p186 = por %p184, %p185
      %p187 = scmp.ne.s32.totalorder %s179, %s182
      %p188 = scmp.eq.s32.totalorder %s22, 0
      %p189 = por %p187, %p188
      %p190 = scmp.ne.s32.totalorder %s179, %s182
      %p191 = scmp.eq.s32.totalorder %s27, 3
      %p192 = por %p190, %p191
      %p193 = scmp.ne.s32.totalorder %s182, %s183
      %p194 = scmp.eq.s32.totalorder %s27, 0
      %p195 = por %p193, %p194
      %p196 = scmp.ne.s32.totalorder %s182, %s183
      %p197 = scmp.eq.s32.totalorder %s28, 3
      %p198 = por %p196, %p197
      %p200 = scmp.ne.s32.totalorder %s183, %s199
      %p201 = scmp.eq.s32.totalorder %s28, 0
      %p202 = por %p200, %p201
      %s203 = ssub.s32 %s22, %s29
      %p204 = scmp.eq.s32.totalorder %s203, 0
      %s206 = sadd.s32 %s205, 1
      %s207 = scalar_select %p204, %s205, %s206
      %p210 = pneg %p204
      %p211 = scmp.eq.s32.totalorder %s22, 3
      %p212 = por %p210, %p211
      %p213 = scmp.ne.s32.totalorder %s205, %s208
      %p214 = scmp.eq.s32.totalorder %s22, 0
      %p215 = por %p213, %p214
      %p216 = scmp.ne.s32.totalorder %s205, %s208
      %p217 = scmp.eq.s32.totalorder %s27, 3
      %p218 = por %p216, %p217
      %p219 = scmp.ne.s32.totalorder %s208, %s209
      %p220 = scmp.eq.s32.totalorder %s27, 0
      %p221 = por %p219, %p220
      %p222 = scmp.ne.s32.totalorder %s208, %s209
      %p223 = scmp.eq.s32.totalorder %s28, 3
      %p224 = por %p222, %p223
      %p226 = scmp.ne.s32.totalorder %s209, %s225
      %p227 = scmp.eq.s32.totalorder %s28, 0
      %p228 = por %p226, %p227
      %s229 = ssub.s32 %s22, %s29
      %p230 = scmp.eq.s32.totalorder %s229, 0
      %s232 = sadd.s32 %s231, 1
      %s233 = scalar_select %p230, %s231, %s232
      %p236 = pneg %p230
      %p237 = scmp.eq.s32.totalorder %s22, 3
      %p238 = por %p236, %p237
      %p239 = scmp.ne.s32.totalorder %s231, %s234
      %p240 = scmp.eq.s32.totalorder %s22, 0
      %p241 = por %p239, %p240
      %p242 = scmp.ne.s32.totalorder %s231, %s234
      %p243 = scmp.eq.s32.totalorder %s27, 3
      %p244 = por %p242, %p243
      %p245 = scmp.ne.s32.totalorder %s234, %s235
      %p246 = scmp.eq.s32.totalorder %s27, 0
      %p247 = por %p245, %p246
      %p248 = scmp.ne.s32.totalorder %s234, %s235
      %p249 = scmp.eq.s32.totalorder %s28, 3
      %p250 = por %p248, %p249
      %p252 = scmp.ne.s32.totalorder %s235, %s251
      %p253 = scmp.eq.s32.totalorder %s28, 0
      %p254 = por %p252, %p253
      %p255 = scmp.le.s32.totalorder 1, %s22
      %p256 = scmp.lt.s32.totalorder %s22, 5
      %p257 = pnand %p255, %p256
      %p258 = pneg %p257
      // Predicated region
      $region9: #{decoder_target.1} parent=5 // pred_check
        _
      $region10: #{decoder_target.1} parent=5 // pred_check_branch
        %260 = sbr.rel (%p257) target = $region12
      $region11: #{decoder_target.1} parent=5 // pred_region
        %s261 = ssub.s32 %s22, 1
        // Predicated region
        $region13: #{decoder_target.1} parent=11 // pred_check
          %p262 = pneg %p43
        $region14: #{decoder_target.1} parent=11 // pred_check_branch
          %264 = sbr.rel (%p262) target = $region16
        $region15: #{decoder_target.1} parent=11 // pred_region
          %s266 = ssub.s32 256, 256
          %267 = vsyncadd [#allocation3], %s266
          %s268 = sshll.u32 [#allocation2], 4
          %s269 = int_to_ptr.vmem [resolvable:$true] %s268
          %274 = dma.hbm_to_vmem [thread:$0]  %s0, 256, %s269, [#allocation3], 128, 128, 8
        $region16: #{decoder_target.1} parent=11 // pred_fallthru
          _
        // Predicated region
        $region17: #{decoder_target.1} parent=11 // pred_check
          %p275 = pneg %p64
        $region18: #{decoder_target.1} parent=11 // pred_check_branch
          %277 = sbr.rel (%p275) target = $region20
        $region19: #{decoder_target.1} parent=11 // pred_region
          %s279 = ssub.s32 1024, 1024
          %280 = vsyncadd [#allocation5], %s279
          %s281 = sshll.u32 [#allocation4], 4
          %s282 = int_to_ptr.vmem [resolvable:$true] %s281
          %287 = dma.hbm_to_vmem [thread:$0]  %s1, 1024, %s282, [#allocation5], 256, 256, 16
        $region20: #{decoder_target.1} parent=11 // pred_fallthru
          _
        // Predicated region
        $region21: #{decoder_target.1} parent=11 // pred_check
          %p288 = pneg %p85
        $region22: #{decoder_target.1} parent=11 // pred_check_branch
          %290 = sbr.rel (%p288) target = $region24
        $region23: #{decoder_target.1} parent=11 // pred_region
          %s292 = ssub.s32 32, 32
          %293 = vsyncadd [#allocation5], %s292
          %s295 = sshll.u32 [#allocation6], 4
          %s296 = int_to_ptr.vmem [resolvable:$true] %s295
          %298 = dma.hbm_to_vmem [thread:$0]  %s2, 32, %s296, [#allocation5]
        $region24: #{decoder_target.1} parent=11 // pred_fallthru
          _
        // Predicated region
        $region25: #{decoder_target.1} parent=11 // pred_check
          %p299 = pneg %p106
        $region26: #{decoder_target.1} parent=11 // pred_check_branch
          %301 = sbr.rel (%p299) target = $region28
        $region27: #{decoder_target.1} parent=11 // pred_region
          %s303 = ssub.s32 32, 32
          %304 = vsyncadd [#allocation8], %s303
          %s306 = sshll.u32 [#allocation7], 4
          %s307 = int_to_ptr.vmem [resolvable:$true] %s306
          %309 = dma.hbm_to_vmem [thread:$0]  %s3, 32, %s307, [#allocation8]
        $region28: #{decoder_target.1} parent=11 // pred_fallthru
          _
        // Predicated region
        $region29: #{decoder_target.1} parent=11 // pred_check
          %p310 = pneg %p127
        $region30: #{decoder_target.1} parent=11 // pred_check_branch
          %312 = sbr.rel (%p310) target = $region32
        $region31: #{decoder_target.1} parent=11 // pred_region
          %s314 = ssub.s32 16384, 16384
          %315 = vsyncadd [#allocation8], %s314
          %s316 = sshll.u32 [#allocation9], 4
          %s317 = int_to_ptr.vmem [resolvable:$true] %s316
          %322 = dma.hbm_to_vmem [thread:$0]  %s4, 16384, %s317, [#allocation8], 512, 512, 32
        $region32: #{decoder_target.1} parent=11 // pred_fallthru
          _
        // Predicated region
        $region33: #{decoder_target.1} parent=11 // pred_check
          %p323 = pneg %p148
        $region34: #{decoder_target.1} parent=11 // pred_check_branch
          %325 = sbr.rel (%p323) target = $region36
        $region35: #{decoder_target.1} parent=11 // pred_region
          %s327 = ssub.s32 64, 64
          %328 = vsyncadd [#allocation11], %s327
          %s330 = sshll.u32 [#allocation10], 4
          %s331 = int_to_ptr.vmem [resolvable:$true] %s330
          %333 = dma.hbm_to_vmem [thread:$0]  %s5, 64, %s331, [#allocation11]
        $region36: #{decoder_target.1} parent=11 // pred_fallthru
          _
        // Predicated region
        $region37: #{decoder_target.1} parent=11 // pred_check
          %p334 = pneg %p169
        $region38: #{decoder_target.1} parent=11 // pred_check_branch
          %336 = sbr.rel (%p334) target = $region40
        $region39: #{decoder_target.1} parent=11 // pred_region
          %s338 = ssub.s32 64, 64
          %339 = vsyncadd [#allocation11], %s338
          %s341 = sshll.u32 [#allocation12], 4
          %s342 = int_to_ptr.vmem [resolvable:$true] %s341
          %344 = dma.hbm_to_vmem [thread:$0]  %s6, 64, %s342, [#allocation11]
        $region40: #{decoder_target.1} parent=11 // pred_fallthru
          _
      $region12: #{decoder_target.1} parent=5 // pred_fallthru
        _
      %p345 = scmp.lt.s32.totalorder %s22, 4
      // Predicated region
      $region41: #{decoder_target.1} parent=5 // pred_check
        %p346 = pneg %p345
      $region42: #{decoder_target.1} parent=5 // pred_check_branch
        %348 = sbr.rel (%p346) target = $region44
      $region43: #{decoder_target.1} parent=5 // pred_region
        // Predicated region
        $region45: #{decoder_target.1} parent=43 // pred_check
          %p349 = pneg %p189
        $region46: #{decoder_target.1} parent=43 // pred_check_branch
          %351 = sbr.rel (%p349) target = $region48
        $region47: #{decoder_target.1} parent=43 // pred_region
          %s352 = sand.u32 %s22, 1
          %s353 = scalar_lea.sflag [#allocation14], %s352
          %s354 = sand.u32 %s179, 1
          %s355 = smul.addr %s354, 2048
          %s356 = scalar_lea.vmem [#allocation13], %s355
          %s357 = smul.u32 8, %s22
          %s359 = ssub.s32 32768, 32768
          %360 = vsyncadd %s353, %s359
          %s361 = smul.addr %s357, 64
          %s362 = scalar_lea.hbm %s7, %s361
          %s363 = sshll.u32 %s356, 4
          %s364 = int_to_ptr.vmem [resolvable:$true] %s363
          %369 = dma.hbm_to_vmem [thread:$0]  %s362, 32768, %s364, %s353, 2048, 512, 32
        $region48: #{decoder_target.1} parent=43 // pred_fallthru
          _
        // Predicated region
        $region49: #{decoder_target.1} parent=43 // pred_check
          %p370 = pneg %p215
        $region50: #{decoder_target.1} parent=43 // pred_check_branch
          %372 = sbr.rel (%p370) target = $region52
        $region51: #{decoder_target.1} parent=43 // pred_region
          %s373 = sand.u32 %s22, 1
          %s374 = scalar_lea.sflag [#allocation14], %s373
          %s375 = sand.u32 %s205, 1
          %s376 = smul.addr %s375, 8
          %s377 = scalar_lea.vmem [#allocation15], %s376
          %s378 = smul.u32 8, %s22
          %s380 = ssub.s32 128, 128
          %381 = vsyncadd %s374, %s380
          %s382 = smul.addr %s378, 16
          %s383 = scalar_lea.hbm %s8, %s382
          %s385 = sshll.u32 %s377, 4
          %s386 = int_to_ptr.vmem [resolvable:$true] %s385
          %388 = dma.hbm_to_vmem [thread:$0]  %s383, 128, %s386, %s374
        $region52: #{decoder_target.1} parent=43 // pred_fallthru
          _
      $region44: #{decoder_target.1} parent=5 // pred_fallthru
        _
      %p389 = scmp.le.s32.totalorder 1, %s22
      %p390 = scmp.lt.s32.totalorder %s22, 5
      %p391 = pnand %p389, %p390
      %p392 = pneg %p391
      // Predicated region
      $region53: #{decoder_target.1} parent=5 // pred_check
        _
      $region54: #{decoder_target.1} parent=5 // pred_check_branch
        %394 = sbr.rel (%p391) target = $region56
      $region55: #{decoder_target.1} parent=5 // pred_region
        %s395 = ssub.s32 %s22, 1
        // Predicated region
        $region57: #{decoder_target.1} parent=55 // pred_check
          %p396 = pneg %p43
        $region58: #{decoder_target.1} parent=55 // pred_check_branch
          %398 = sbr.rel (%p396) target = $region60
        $region59: #{decoder_target.1} parent=55 // pred_region
          %399 = dma.done [#allocation3], 256
        $region60: #{decoder_target.1} parent=55 // pred_fallthru
          _
        // Predicated region
        $region61: #{decoder_target.1} parent=55 // pred_check
          %p400 = pneg %p64
        $region62: #{decoder_target.1} parent=55 // pred_check_branch
          %402 = sbr.rel (%p400) target = $region64
        $region63: #{decoder_target.1} parent=55 // pred_region
          %403 = dma.done [#allocation5], 1024
        $region64: #{decoder_target.1} parent=55 // pred_fallthru
          _
        // Predicated region
        $region65: #{decoder_target.1} parent=55 // pred_check
          %p404 = pneg %p85
        $region66: #{decoder_target.1} parent=55 // pred_check_branch
          %406 = sbr.rel (%p404) target = $region68
        $region67: #{decoder_target.1} parent=55 // pred_region
          %407 = dma.done [#allocation5], 32
        $region68: #{decoder_target.1} parent=55 // pred_fallthru
          _
        // Predicated region
        $region69: #{decoder_target.1} parent=55 // pred_check
          %p408 = pneg %p106
        $region70: #{decoder_target.1} parent=55 // pred_check_branch
          %410 = sbr.rel (%p408) target = $region72
        $region71: #{decoder_target.1} parent=55 // pred_region
          %411 = dma.done [#allocation8], 32
        $region72: #{decoder_target.1} parent=55 // pred_fallthru
          _
        // Predicated region
        $region73: #{decoder_target.1} parent=55 // pred_check
          %p412 = pneg %p127
        $region74: #{decoder_target.1} parent=55 // pred_check_branch
          %414 = sbr.rel (%p412) target = $region76
        $region75: #{decoder_target.1} parent=55 // pred_region
          %415 = dma.done [#allocation8], 16384
        $region76: #{decoder_target.1} parent=55 // pred_fallthru
          _
        // Predicated region
        $region77: #{decoder_target.1} parent=55 // pred_check
          %p416 = pneg %p148
        $region78: #{decoder_target.1} parent=55 // pred_check_branch
          %418 = sbr.rel (%p416) target = $region80
        $region79: #{decoder_target.1} parent=55 // pred_region
          %419 = dma.done [#allocation11], 64
        $region80: #{decoder_target.1} parent=55 // pred_fallthru
          _
        // Predicated region
        $region81: #{decoder_target.1} parent=55 // pred_check
          %p420 = pneg %p169
        $region82: #{decoder_target.1} parent=55 // pred_check_branch
          %422 = sbr.rel (%p420) target = $region84
        $region83: #{decoder_target.1} parent=55 // pred_region
          %423 = dma.done [#allocation11], 64
        $region84: #{decoder_target.1} parent=55 // pred_fallthru
          _
        %s424 = sand.u32 %s27, 1
        %s425 = scalar_lea.sflag [#allocation14], %s424
        %s426 = sand.u32 %s182, 1
        %s427 = smul.addr %s426, 2048
        %s428 = scalar_lea.vmem [#allocation13], %s427
        // Predicated region
        $region85: #{decoder_target.1} parent=55 // pred_check
          %p429 = pneg %p195
        $region86: #{decoder_target.1} parent=55 // pred_check_branch
          %431 = sbr.rel (%p429) target = $region88
        $region87: #{decoder_target.1} parent=55 // pred_region
          %432 = dma.done %s425, 32768
        $region88: #{decoder_target.1} parent=55 // pred_fallthru
          _
        %s433 = sand.u32 %s27, 1
        %s434 = scalar_lea.sflag [#allocation14], %s433
        %s435 = sand.u32 %s208, 1
        %s436 = smul.addr %s435, 8
        %s437 = scalar_lea.vmem [#allocation15], %s436
        // Predicated region
        $region89: #{decoder_target.1} parent=55 // pred_check
          %p438 = pneg %p221
        $region90: #{decoder_target.1} parent=55 // pred_check_branch
          %440 = sbr.rel (%p438) target = $region92
        $region91: #{decoder_target.1} parent=55 // pred_region
          %441 = dma.done %s434, 128
        $region92: #{decoder_target.1} parent=55 // pred_fallthru
          _
        %p442 = pneg %p43
        %p443 = pneg %p40
        %p444 = pneg %p64
        %p445 = pneg %p61
        %p446 = pneg %p85
        %p447 = pneg %p82
        %p448 = pneg %p106
        %p449 = pneg %p103
        %p450 = pneg %p127
        %p451 = pneg %p124
        %p452 = pneg %p148
        %p453 = pneg %p145
        %p454 = pneg %p169
        %p455 = pneg %p166
        %s456 = sand.u32 %s27, 1
        %s457 = scalar_lea.sflag [#allocation14], %s456
        %s458 = sand.u32 %s182, 1
        %s459 = smul.addr %s458, 2048
        %s460 = scalar_lea.vmem [#allocation13], %s459
        %p461 = pneg %p195
        %p462 = pneg %p192
        %s463 = sand.u32 %s27, 1
        %s464 = scalar_lea.sflag [#allocation14], %s463
        %s465 = sand.u32 %s208, 1
        %s466 = smul.addr %s465, 8
        %s467 = scalar_lea.vmem [#allocation15], %s466
        %p468 = pneg %p221
        %p469 = pneg %p218
        %p470 = pneg %p247
        %p471 = pneg %p244
        %s472 = sand.u32 %s234, 1
        %s473 = sand.u32 %s234, 1
        %s474 = smul.addr %s473, 128
        %s475 = scalar_lea.vmem [#allocation16], %s474
        %s476 = smul.u32 8, %s27
        %s477 = smul.u32 8, %s27
        %s478 = smul.u32 8, %s27
        %v479 = vld [vmem:[#allocation2] sm:$0xff]
        %v480 = vld [vmem:[#allocation2 + $0x8] sm:$0xff]
        %v481 = vld [vmem:[#allocation4] sm:$0xff]
        %v482 = vld [vmem:[#allocation4 + $0x8] sm:$0xff]
        %v483 = vld [vmem:[#allocation4 + $0x10] sm:$0xff]
        %v484 = vld [vmem:[#allocation4 + $0x18] sm:$0xff]
        %v485 = vld [vmem:[#allocation4 + $0x20] sm:$0xff]
        %v486 = vld [vmem:[#allocation4 + $0x28] sm:$0xff]
        %v487 = vld [vmem:[#allocation4 + $0x30] sm:$0xff]
        %v488 = vld [vmem:[#allocation4 + $0x38] sm:$0xff]
        %vm489 = vcmask 261120
        %v491 = vsel %vm489, %v479, 0
        %v494 = vsel %vm489, %v480, 0
        %496 = vmatprep.subr.mxu0 0.0
        %497 = vmatpush1.msra.mxu0 0.0
        %498 = vmatprep.subr.mxu0 0.0
        %499 = vmatpush1.msra.mxu0 0.0
        %500 = vmatprep.subr.mxu0 0.0
        %501 = vmatpush1.msra.mxu0 0.0
        %502 = vmatprep.subr.mxu0 0.0
        %503 = vmatpush1.msra.mxu0 0.0
        %504 = vmatprep.subr.mxu0 0.0
        %505 = vmatpush1.msra.mxu0 0.0
        %506 = vmatprep.subr.mxu0 0.0
        %507 = vmatpush1.msra.mxu0 0.0
        %508 = vmatprep.subr.mxu0 0.0
        %509 = vmatpush1.msra.mxu0 0.0
        %510 = vmatprep.subr.mxu0 0.0
        %511 = vmatpush1.msra.mxu0 0.0
        %512 = vmatprep.subr.mxu0 0.0
        %513 = vmatpush1.msra.mxu0 0.0
        %514 = vmatprep.subr.mxu0 0.0
        %515 = vmatpush1.msra.mxu0 0.0
        %516 = vmatprep.subr.mxu0 0.0
        %517 = vmatpush1.msra.mxu0 0.0
        %518 = vmatprep.subr.mxu0 0.0
        %519 = vmatpush1.msra.mxu0 0.0
        %520 = vmatprep.subr.mxu0 %v488
        %521 = vmatpush1.msra.mxu0 %v487
        %522 = vmatprep.subr.mxu0 %v486
        %523 = vmatpush1.msra.mxu0 %v485
        %524 = vmatprep.subr.mxu0 %v484
        %525 = vmatpush1.msra.mxu0 %v483
        %526 = vmatprep.subr.mxu0 %v482
        %527 = vmatpush1.msra.mxu0 %v481
        %528 = vmatprep.subr.mxu0 0.0
        %529 = vmatpush2.msra.mxu0 0.0
        %530 = vmatprep.subr.mxu0 0.0
        %531 = vmatpush2.msra.mxu0 0.0
        %532 = vmatprep.subr.mxu0 0.0
        %533 = vmatpush2.msra.mxu0 0.0
        %534 = vmatprep.subr.mxu0 0.0
        %535 = vmatpush2.msra.mxu0 0.0
        %536 = vmatprep.subr.mxu0 0.0
        %537 = vmatpush2.msra.mxu0 0.0
        %538 = vmatprep.subr.mxu0 0.0
        %539 = vmatpush2.msra.mxu0 0.0
        %540 = vmatprep.subr.mxu0 0.0
        %541 = vmatpush2.msra.mxu0 0.0
        %542 = vmatprep.subr.mxu0 0.0
        %543 = vmatpush2.msra.mxu0 0.0
        %544 = vmatprep.subr.mxu0 0.0
        %545 = vmatpush2.msra.mxu0 0.0
        %546 = vmatprep.subr.mxu0 0.0
        %547 = vmatpush2.msra.mxu0 0.0
        %548 = vmatprep.subr.mxu0 0.0
        %549 = vmatpush2.msra.mxu0 0.0
        %550 = vmatprep.subr.mxu0 0.0
        %551 = vmatpush2.msra.mxu0 0.0
        %552 = vmatprep.subr.mxu0 0.0
        %553 = vmatpush2.msra.mxu0 0.0
        %554 = vmatprep.subr.mxu0 0.0
        %555 = vmatpush2.msra.mxu0 0.0
        %556 = vmatprep.subr.mxu0 0.0
        %557 = vmatpush2.msra.mxu0 0.0
        %558 = vmatprep.subr.mxu0 0.0
        %559 = vmatpush2.msra.mxu0 0.0
        %560 = vmatprep.mubr.f32.mxu0 0.0
        %561 = vmatmul.mubr.f32.gmra.mxu0 %v491
        %v562 = vpop.f32.mrf.mxu0
        %v563 = vadd.f32 0.0, %v562
        %v564 = vpop.f32.mrf.mxu0
        %v565 = vadd.f32 0.0, %v564
        %566 = vmatprep.mubr.f32.mxu0 0.0
        %567 = vmatmul.mubr.f32.gmra.mxu0 %v494
        %v568 = vpop.f32.mrf.mxu0
        %v569 = vadd.f32 0.0, %v568
        %v570 = vpop.f32.mrf.mxu0
        %v571 = vadd.f32 0.0, %v570
        %572 = vdwg.mxu0
        %v573 = vadd.f32 %v563, %v569
        %v574 = vrot.slane %v573, 4
        %v575 = vadd.f32 %v573, %v574
        %v576 = vrot.slane %v575, 2
        %v577 = vadd.f32 %v575, %v576
        %v578 = vrot.slane %v577, 1
        %v579 = vadd.f32 %v577, %v578
        %v580 = vadd.f32 %v565, %v571
        %v581 = vrot.slane %v580, 4
        %v582 = vadd.f32 %v580, %v581
        %v583 = vrot.slane %v582, 2
        %v584 = vadd.f32 %v582, %v583
        %v585 = vrot.slane %v584, 1
        %v586 = vadd.f32 %v584, %v585
        %v587 = vrcp.pop 16.0
        %v588 = vmul.f32 %v579, %v587
        %v589 = vmul.f32 %v586, %v587
        %v590 = vmul.f32 %v563, %v563
        %v591 = vmul.f32 %v565, %v565
        %v592 = vmul.f32 %v569, %v569
        %v593 = vmul.f32 %v571, %v571
        %v594 = vadd.f32 %v590, %v592
        %v595 = vrot.slane %v594, 4
        %v596 = vadd.f32 %v594, %v595
        %v597 = vrot.slane %v596, 2
        %v598 = vadd.f32 %v596, %v597
        %v599 = vrot.slane %v598, 1
        %v600 = vadd.f32 %v598, %v599
        %v601 = vadd.f32 %v591, %v593
        %v602 = vrot.slane %v601, 4
        %v603 = vadd.f32 %v601, %v602
        %v604 = vrot.slane %v603, 2
        %v605 = vadd.f32 %v603, %v604
        %v606 = vrot.slane %v605, 1
        %v607 = vadd.f32 %v605, %v606
        %v608 = vmul.f32 %v600, %v587
        %v609 = vmul.f32 %v607, %v587
        %v610 = vmul.f32 %v588, %v588
        %v611 = vmul.f32 %v589, %v589
        %v612 = vsub.f32 %v608, %v610
        %v613 = vsub.f32 %v609, %v611
        %v614 = vsub.f32 %v563, %v588
        %v615 = vsub.f32 %v565, %v589
        %v616 = vsub.f32 %v569, %v588
        %v617 = vsub.f32 %v571, %v589
        %v618 = vadd.f32 %v612, 1e-05
        %v619 = vadd.f32 %v613, 1e-05
        %v620 = vrsqrt.pop %v618
        %v621 = vrsqrt.pop %v619
        %v622 = vmul.f32 %v614, %v620
        %v623 = vmul.f32 %v615, %v621
        %v624 = vmul.f32 %v616, %v620
        %v625 = vmul.f32 %v617, %v621
        %v626 = vld [vmem:[#allocation6] sm:$0x3]
        %v628 = vlaneseq
        %v629 = vshrl.u32 %v628, 7
        %v630 = vsub.s32 0, %v629
        %v631 = vrot.slane %v626, %v630
        %v632 = vlaneseq
        %v633 = vshrl.u32 %v632, 7
        %v634 = vsub.s32 1, %v633
        %v635 = vrot.slane %v626, %v634
        %v638 = vmul.f32 %v622, %v631
        %v639 = vmul.f32 %v623, %v635
        %v640 = vmul.f32 %v624, %v631
        %v641 = vmul.f32 %v625, %v635
        %v642 = vld [vmem:[#allocation7] sm:$0x3]
        %v644 = vlaneseq
        %v645 = vshrl.u32 %v644, 7
        %v646 = vsub.s32 0, %v645
        %v647 = vrot.slane %v642, %v646
        %v648 = vlaneseq
        %v649 = vshrl.u32 %v648, 7
        %v650 = vsub.s32 1, %v649
        %v651 = vrot.slane %v642, %v650
        %v654 = vadd.f32 %v638, %v647
        %v655 = vadd.f32 %v639, %v651
        %v656 = vadd.f32 %v640, %v647
        %v657 = vadd.f32 %v641, %v651
        %v658 = vmax.f32 %v654, 0.0
        %v659 = vmax.f32 %v655, 0.0
        %v660 = vmax.f32 %v656, 0.0
        %v661 = vmax.f32 %v657, 0.0
        %v662 = vld [vmem:[#allocation9] sm:$0xff]
        %v663 = vld [vmem:[#allocation9 + $0x8] sm:$0xff]
        %v664 = vld [vmem:[#allocation9 + $0x10] sm:$0xff]
        %v665 = vld [vmem:[#allocation9 + $0x18] sm:$0xff]
        %v666 = vld [vmem:[#allocation9 + $0x20] sm:$0xff]
        %v667 = vld [vmem:[#allocation9 + $0x28] sm:$0xff]
        %v668 = vld [vmem:[#allocation9 + $0x30] sm:$0xff]
        %v669 = vld [vmem:[#allocation9 + $0x38] sm:$0xff]
        %v670 = vld [vmem:[#allocation9 + $0x40] sm:$0xff]
        %v671 = vld [vmem:[#allocation9 + $0x48] sm:$0xff]
        %v672 = vld [vmem:[#allocation9 + $0x50] sm:$0xff]
        %v673 = vld [vmem:[#allocation9 + $0x58] sm:$0xff]
        %v674 = vld [vmem:[#allocation9 + $0x60] sm:$0xff]
        %v675 = vld [vmem:[#allocation9 + $0x68] sm:$0xff]
        %v676 = vld [vmem:[#allocation9 + $0x70] sm:$0xff]
        %v677 = vld [vmem:[#allocation9 + $0x78] sm:$0xff]
        %v678 = vld [vmem:[#allocation9 + $0x80] sm:$0xff]
        %v679 = vld [vmem:[#allocation9 + $0x88] sm:$0xff]
        %v680 = vld [vmem:[#allocation9 + $0x90] sm:$0xff]
        %v681 = vld [vmem:[#allocation9 + $0x98] sm:$0xff]
        %v682 = vld [vmem:[#allocation9 + $0xa0] sm:$0xff]
        %v683 = vld [vmem:[#allocation9 + $0xa8] sm:$0xff]
        %v684 = vld [vmem:[#allocation9 + $0xb0] sm:$0xff]
        %v685 = vld [vmem:[#allocation9 + $0xb8] sm:$0xff]
        %v686 = vld [vmem:[#allocation9 + $0xc0] sm:$0xff]
        %v687 = vld [vmem:[#allocation9 + $0xc8] sm:$0xff]
        %v688 = vld [vmem:[#allocation9 + $0xd0] sm:$0xff]
        %v689 = vld [vmem:[#allocation9 + $0xd8] sm:$0xff]
        %v690 = vld [vmem:[#allocation9 + $0xe0] sm:$0xff]
        %v691 = vld [vmem:[#allocation9 + $0xe8] sm:$0xff]
        %v692 = vld [vmem:[#allocation9 + $0xf0] sm:$0xff]
        %v693 = vld [vmem:[#allocation9 + $0xf8] sm:$0xff]
        %v694 = vld [vmem:[#allocation9 + $0x100] sm:$0xff]
        %v695 = vld [vmem:[#allocation9 + $0x108] sm:$0xff]
        %v696 = vld [vmem:[#allocation9 + $0x110] sm:$0xff]
        %v697 = vld [vmem:[#allocation9 + $0x118] sm:$0xff]
        %v698 = vld [vmem:[#allocation9 + $0x120] sm:$0xff]
        %v699 = vld [vmem:[#allocation9 + $0x128] sm:$0xff]
        %v700 = vld [vmem:[#allocation9 + $0x130] sm:$0xff]
        %v701 = vld [vmem:[#allocation9 + $0x138] sm:$0xff]
        %v702 = vld [vmem:[#allocation9 + $0x140] sm:$0xff]
        %v703 = vld [vmem:[#allocation9 + $0x148] sm:$0xff]
        %v704 = vld [vmem:[#allocation9 + $0x150] sm:$0xff]
        %v705 = vld [vmem:[#allocation9 + $0x158] sm:$0xff]
        %v706 = vld [vmem:[#allocation9 + $0x160] sm:$0xff]
        %v707 = vld [vmem:[#allocation9 + $0x168] sm:$0xff]
        %v708 = vld [vmem:[#allocation9 + $0x170] sm:$0xff]
        %v709 = vld [vmem:[#allocation9 + $0x178] sm:$0xff]
        %v710 = vld [vmem:[#allocation9 + $0x180] sm:$0xff]
        %v711 = vld [vmem:[#allocation9 + $0x188] sm:$0xff]
        %v712 = vld [vmem:[#allocation9 + $0x190] sm:$0xff]
        %v713 = vld [vmem:[#allocation9 + $0x198] sm:$0xff]
        %v714 = vld [vmem:[#allocation9 + $0x1a0] sm:$0xff]
        %v715 = vld [vmem:[#allocation9 + $0x1a8] sm:$0xff]
        %v716 = vld [vmem:[#allocation9 + $0x1b0] sm:$0xff]
        %v717 = vld [vmem:[#allocation9 + $0x1b8] sm:$0xff]
        %v718 = vld [vmem:[#allocation9 + $0x1c0] sm:$0xff]
        %v719 = vld [vmem:[#allocation9 + $0x1c8] sm:$0xff]
        %v720 = vld [vmem:[#allocation9 + $0x1d0] sm:$0xff]
        %v721 = vld [vmem:[#allocation9 + $0x1d8] sm:$0xff]
        %v722 = vld [vmem:[#allocation9 + $0x1e0] sm:$0xff]
        %v723 = vld [vmem:[#allocation9 + $0x1e8] sm:$0xff]
        %v724 = vld [vmem:[#allocation9 + $0x1f0] sm:$0xff]
        %v725 = vld [vmem:[#allocation9 + $0x1f8] sm:$0xff]
        %v726 = vld [vmem:[#allocation9 + $0x200] sm:$0xff]
        %v727 = vld [vmem:[#allocation9 + $0x208] sm:$0xff]
        %v728 = vld [vmem:[#allocation9 + $0x210] sm:$0xff]
        %v729 = vld [vmem:[#allocation9 + $0x218] sm:$0xff]
        %v730 = vld [vmem:[#allocation9 + $0x220] sm:$0xff]
        %v731 = vld [vmem:[#allocation9 + $0x228] sm:$0xff]
        %v732 = vld [vmem:[#allocation9 + $0x230] sm:$0xff]
        %v733 = vld [vmem:[#allocation9 + $0x238] sm:$0xff]
        %v734 = vld [vmem:[#allocation9 + $0x240] sm:$0xff]
        %v735 = vld [vmem:[#allocation9 + $0x248] sm:$0xff]
        %v736 = vld [vmem:[#allocation9 + $0x250] sm:$0xff]
        %v737 = vld [vmem:[#allocation9 + $0x258] sm:$0xff]
        %v738 = vld [vmem:[#allocation9 + $0x260] sm:$0xff]
        %v739 = vld [vmem:[#allocation9 + $0x268] sm:$0xff]
        %v740 = vld [vmem:[#allocation9 + $0x270] sm:$0xff]
        %v741 = vld [vmem:[#allocation9 + $0x278] sm:$0xff]
        %v742 = vld [vmem:[#allocation9 + $0x280] sm:$0xff]
        %v743 = vld [vmem:[#allocation9 + $0x288] sm:$0xff]
        %v744 = vld [vmem:[#allocation9 + $0x290] sm:$0xff]
        %v745 = vld [vmem:[#allocation9 + $0x298] sm:$0xff]
        %v746 = vld [vmem:[#allocation9 + $0x2a0] sm:$0xff]
        %v747 = vld [vmem:[#allocation9 + $0x2a8] sm:$0xff]
        %v748 = vld [vmem:[#allocation9 + $0x2b0] sm:$0xff]
        %v749 = vld [vmem:[#allocation9 + $0x2b8] sm:$0xff]
        %v750 = vld [vmem:[#allocation9 + $0x2c0] sm:$0xff]
        %v751 = vld [vmem:[#allocation9 + $0x2c8] sm:$0xff]
        %v752 = vld [vmem:[#allocation9 + $0x2d0] sm:$0xff]
        %v753 = vld [vmem:[#allocation9 + $0x2d8] sm:$0xff]
        %v754 = vld [vmem:[#allocation9 + $0x2e0] sm:$0xff]
        %v755 = vld [vmem:[#allocation9 + $0x2e8] sm:$0xff]
        %v756 = vld [vmem:[#allocation9 + $0x2f0] sm:$0xff]
        %v757 = vld [vmem:[#allocation9 + $0x2f8] sm:$0xff]
        %v758 = vld [vmem:[#allocation9 + $0x300] sm:$0xff]
        %v759 = vld [vmem:[#allocation9 + $0x308] sm:$0xff]
        %v760 = vld [vmem:[#allocation9 + $0x310] sm:$0xff]
        %v761 = vld [vmem:[#allocation9 + $0x318] sm:$0xff]
        %v762 = vld [vmem:[#allocation9 + $0x320] sm:$0xff]
        %v763 = vld [vmem:[#allocation9 + $0x328] sm:$0xff]
        %v764 = vld [vmem:[#allocation9 + $0x330] sm:$0xff]
        %v765 = vld [vmem:[#allocation9 + $0x338] sm:$0xff]
        %v766 = vld [vmem:[#allocation9 + $0x340] sm:$0xff]
        %v767 = vld [vmem:[#allocation9 + $0x348] sm:$0xff]
        %v768 = vld [vmem:[#allocation9 + $0x350] sm:$0xff]
        %v769 = vld [vmem:[#allocation9 + $0x358] sm:$0xff]
        %v770 = vld [vmem:[#allocation9 + $0x360] sm:$0xff]
        %v771 = vld [vmem:[#allocation9 + $0x368] sm:$0xff]
        %v772 = vld [vmem:[#allocation9 + $0x370] sm:$0xff]
        %v773 = vld [vmem:[#allocation9 + $0x378] sm:$0xff]
        %v774 = vld [vmem:[#allocation9 + $0x380] sm:$0xff]
        %v775 = vld [vmem:[#allocation9 + $0x388] sm:$0xff]
        %v776 = vld [vmem:[#allocation9 + $0x390] sm:$0xff]
        %v777 = vld [vmem:[#allocation9 + $0x398] sm:$0xff]
        %v778 = vld [vmem:[#allocation9 + $0x3a0] sm:$0xff]
        %v779 = vld [vmem:[#allocation9 + $0x3a8] sm:$0xff]
        %v780 = vld [vmem:[#allocation9 + $0x3b0] sm:$0xff]
        %v781 = vld [vmem:[#allocation9 + $0x3b8] sm:$0xff]
        %v782 = vld [vmem:[#allocation9 + $0x3c0] sm:$0xff]
        %v783 = vld [vmem:[#allocation9 + $0x3c8] sm:$0xff]
        %v784 = vld [vmem:[#allocation9 + $0x3d0] sm:$0xff]
        %v785 = vld [vmem:[#allocation9 + $0x3d8] sm:$0xff]
        %v786 = vld [vmem:[#allocation9 + $0x3e0] sm:$0xff]
        %v787 = vld [vmem:[#allocation9 + $0x3e8] sm:$0xff]
        %v788 = vld [vmem:[#allocation9 + $0x3f0] sm:$0xff]
        %v789 = vld [vmem:[#allocation9 + $0x3f8] sm:$0xff]
        %790 = vmatprep.subr.mxu0 %v723
        %791 = vmatpush1.msra.mxu0 %v722
        %792 = vmatprep.subr.mxu0 %v719
        %793 = vmatpush1.msra.mxu0 %v718
        %794 = vmatprep.subr.mxu0 %v715
        %795 = vmatpush1.msra.mxu0 %v714
        %796 = vmatprep.subr.mxu0 %v711
        %797 = vmatpush1.msra.mxu0 %v710
        %798 = vmatprep.subr.mxu0 %v707
        %799 = vmatpush1.msra.mxu0 %v706
        %800 = vmatprep.subr.mxu0 %v703
        %801 = vmatpush1.msra.mxu0 %v702
        %802 = vmatprep.subr.mxu0 %v699
        %803 = vmatpush1.msra.mxu0 %v698
        %804 = vmatprep.subr.mxu0 %v695
        %805 = vmatpush1.msra.mxu0 %v694
        %806 = vmatprep.subr.mxu0 %v691
        %807 = vmatpush1.msra.mxu0 %v690
        %808 = vmatprep.subr.mxu0 %v687
        %809 = vmatpush1.msra.mxu0 %v686
        %810 = vmatprep.subr.mxu0 %v683
        %811 = vmatpush1.msra.mxu0 %v682
        %812 = vmatprep.subr.mxu0 %v679
        %813 = vmatpush1.msra.mxu0 %v678
        %814 = vmatprep.subr.mxu0 %v675
        %815 = vmatpush1.msra.mxu0 %v674
        %816 = vmatprep.subr.mxu0 %v671
        %817 = vmatpush1.msra.mxu0 %v670
        %818 = vmatprep.subr.mxu0 %v667
        %819 = vmatpush1.msra.mxu0 %v666
        %820 = vmatprep.subr.mxu0 %v663
        %821 = vmatpush1.msra.mxu0 %v662
        %822 = vmatprep.subr.mxu0 %v787
        %823 = vmatpush2.msra.mxu0 %v786
        %824 = vmatprep.subr.mxu0 %v783
        %825 = vmatpush2.msra.mxu0 %v782
        %826 = vmatprep.subr.mxu0 %v779
        %827 = vmatpush2.msra.mxu0 %v778
        %828 = vmatprep.subr.mxu0 %v775
        %829 = vmatpush2.msra.mxu0 %v774
        %830 = vmatprep.subr.mxu0 %v771
        %831 = vmatpush2.msra.mxu0 %v770
        %832 = vmatprep.subr.mxu0 %v767
        %833 = vmatpush2.msra.mxu0 %v766
        %834 = vmatprep.subr.mxu0 %v763
        %835 = vmatpush2.msra.mxu0 %v762
        %836 = vmatprep.subr.mxu0 %v759
        %837 = vmatpush2.msra.mxu0 %v758
        %838 = vmatprep.subr.mxu0 %v755
        %839 = vmatpush2.msra.mxu0 %v754
        %840 = vmatprep.subr.mxu0 %v751
        %841 = vmatpush2.msra.mxu0 %v750
        %842 = vmatprep.subr.mxu0 %v747
        %843 = vmatpush2.msra.mxu0 %v746
        %844 = vmatprep.subr.mxu0 %v743
        %845 = vmatpush2.msra.mxu0 %v742
        %846 = vmatprep.subr.mxu0 %v739
        %847 = vmatpush2.msra.mxu0 %v738
        %848 = vmatprep.subr.mxu0 %v735
        %849 = vmatpush2.msra.mxu0 %v734
        %850 = vmatprep.subr.mxu0 %v731
        %851 = vmatpush2.msra.mxu0 %v730
        %852 = vmatprep.subr.mxu0 %v727
        %853 = vmatpush2.msra.mxu0 %v726
        %854 = vmatprep.mubr.f32.mxu0 %v659
        %855 = vmatmul.mubr.f32.gmra.mxu0 %v658
        %v856 = vpop.f32.mrf.mxu0
        %v857 = vadd.f32 0.0, %v856
        %v858 = vpop.f32.mrf.mxu0
        %v859 = vadd.f32 0.0, %v858
        %860 = vmatprep.mubr.f32.mxu0 %v661
        %861 = vmatmul.mubr.f32.gmra.mxu0 %v660
        %v862 = vpop.f32.mrf.mxu0
        %v863 = vadd.f32 0.0, %v862
        %v864 = vpop.f32.mrf.mxu0
        %v865 = vadd.f32 0.0, %v864
        %866 = vdwg.mxu0
        %867 = vmatprep.subr.mxu0 %v725
        %868 = vmatpush1.msra.mxu0 %v724
        %869 = vmatprep.subr.mxu0 %v721
        %870 = vmatpush1.msra.mxu0 %v720
        %871 = vmatprep.subr.mxu0 %v717
        %872 = vmatpush1.msra.mxu0 %v716
        %873 = vmatprep.subr.mxu0 %v713
        %874 = vmatpush1.msra.mxu0 %v712
        %875 = vmatprep.subr.mxu0 %v709
        %876 = vmatpush1.msra.mxu0 %v708
        %877 = vmatprep.subr.mxu0 %v705
        %878 = vmatpush1.msra.mxu0 %v704
        %879 = vmatprep.subr.mxu0 %v701
        %880 = vmatpush1.msra.mxu0 %v700
        %881 = vmatprep.subr.mxu0 %v697
        %882 = vmatpush1.msra.mxu0 %v696
        %883 = vmatprep.subr.mxu0 %v693
        %884 = vmatpush1.msra.mxu0 %v692
        %885 = vmatprep.subr.mxu0 %v689
        %886 = vmatpush1.msra.mxu0 %v688
        %887 = vmatprep.subr.mxu0 %v685
        %888 = vmatpush1.msra.mxu0 %v684
        %889 = vmatprep.subr.mxu0 %v681
        %890 = vmatpush1.msra.mxu0 %v680
        %891 = vmatprep.subr.mxu0 %v677
        %892 = vmatpush1.msra.mxu0 %v676
        %893 = vmatprep.subr.mxu0 %v673
        %894 = vmatpush1.msra.mxu0 %v672
        %895 = vmatprep.subr.mxu0 %v669
        %896 = vmatpush1.msra.mxu0 %v668
        %897 = vmatprep.subr.mxu0 %v665
        %898 = vmatpush1.msra.mxu0 %v664
        %899 = vmatprep.subr.mxu0 %v789
        %900 = vmatpush2.msra.mxu0 %v788
        %901 = vmatprep.subr.mxu0 %v785
        %902 = vmatpush2.msra.mxu0 %v784
        %903 = vmatprep.subr.mxu0 %v781
        %904 = vmatpush2.msra.mxu0 %v780
        %905 = vmatprep.subr.mxu0 %v777
        %906 = vmatpush2.msra.mxu0 %v776
        %907 = vmatprep.subr.mxu0 %v773
        %908 = vmatpush2.msra.mxu0 %v772
        %909 = vmatprep.subr.mxu0 %v769
        %910 = vmatpush2.msra.mxu0 %v768
        %911 = vmatprep.subr.mxu0 %v765
        %912 = vmatpush2.msra.mxu0 %v764
        %913 = vmatprep.subr.mxu0 %v761
        %914 = vmatpush2.msra.mxu0 %v760
        %915 = vmatprep.subr.mxu0 %v757
        %916 = vmatpush2.msra.mxu0 %v756
        %917 = vmatprep.subr.mxu0 %v753
        %918 = vmatpush2.msra.mxu0 %v752
        %919 = vmatprep.subr.mxu0 %v749
        %920 = vmatpush2.msra.mxu0 %v748
        %921 = vmatprep.subr.mxu0 %v745
        %922 = vmatpush2.msra.mxu0 %v744
        %923 = vmatprep.subr.mxu0 %v741
        %924 = vmatpush2.msra.mxu0 %v740
        %925 = vmatprep.subr.mxu0 %v737
        %926 = vmatpush2.msra.mxu0 %v736
        %927 = vmatprep.subr.mxu0 %v733
        %928 = vmatpush2.msra.mxu0 %v732
        %929 = vmatprep.subr.mxu0 %v729
        %930 = vmatpush2.msra.mxu0 %v728
        %931 = vmatprep.mubr.f32.mxu0 %v659
        %932 = vmatmul.mubr.f32.gmra.mxu0 %v658
        %v933 = vpop.f32.mrf.mxu0
        %v934 = vadd.f32 0.0, %v933
        %v935 = vpop.f32.mrf.mxu0
        %v936 = vadd.f32 0.0, %v935
        %937 = vmatprep.mubr.f32.mxu0 %v661
        %938 = vmatmul.mubr.f32.gmra.mxu0 %v660
        %v939 = vpop.f32.mrf.mxu0
        %v940 = vadd.f32 0.0, %v939
        %v941 = vpop.f32.mrf.mxu0
        %v942 = vadd.f32 0.0, %v941
        %943 = vdwg.mxu0
        %v944 = vadd.f32 %v857, %v863
        %v945 = vrot.slane %v944, 4
        %v946 = vadd.f32 %v944, %v945
        %v947 = vrot.slane %v946, 2
        %v948 = vadd.f32 %v946, %v947
        %v949 = vrot.slane %v948, 1
        %v950 = vadd.f32 %v948, %v949
        %v951 = vadd.f32 %v859, %v865
        %v952 = vrot.slane %v951, 4
        %v953 = vadd.f32 %v951, %v952
        %v954 = vrot.slane %v953, 2
        %v955 = vadd.f32 %v953, %v954
        %v956 = vrot.slane %v955, 1
        %v957 = vadd.f32 %v955, %v956
        %v958 = vadd.f32 %v934, %v940
        %v959 = vrot.slane %v958, 4
        %v960 = vadd.f32 %v958, %v959
        %v961 = vrot.slane %v960, 2
        %v962 = vadd.f32 %v960, %v961
        %v963 = vrot.slane %v962, 1
        %v964 = vadd.f32 %v962, %v963
        %v965 = vadd.f32 %v936, %v942
        %v966 = vrot.slane %v965, 4
        %v967 = vadd.f32 %v965, %v966
        %v968 = vrot.slane %v967, 2
        %v969 = vadd.f32 %v967, %v968
        %v970 = vrot.slane %v969, 1
        %v971 = vadd.f32 %v969, %v970
        %v972 = vmul.f32 %v950, %v587
        %v973 = vmul.f32 %v957, %v587
        %v974 = vmul.f32 %v964, %v587
        %v975 = vmul.f32 %v971, %v587
        %v976 = vmul.f32 %v857, %v857
        %v977 = vmul.f32 %v859, %v859
        %v978 = vmul.f32 %v934, %v934
        %v979 = vmul.f32 %v936, %v936
        %v980 = vmul.f32 %v863, %v863
        %v981 = vmul.f32 %v865, %v865
        %v982 = vmul.f32 %v940, %v940
        %v983 = vmul.f32 %v942, %v942
        %v984 = vadd.f32 %v976, %v980
        %v985 = vrot.slane %v984, 4
        %v986 = vadd.f32 %v984, %v985
        %v987 = vrot.slane %v986, 2
        %v988 = vadd.f32 %v986, %v987
        %v989 = vrot.slane %v988, 1
        %v990 = vadd.f32 %v988, %v989
        %v991 = vadd.f32 %v977, %v981
        %v992 = vrot.slane %v991, 4
        %v993 = vadd.f32 %v991, %v992
        %v994 = vrot.slane %v993, 2
        %v995 = vadd.f32 %v993, %v994
        %v996 = vrot.slane %v995, 1
        %v997 = vadd.f32 %v995, %v996
        %v998 = vadd.f32 %v978, %v982
        %v999 = vrot.slane %v998, 4
        %v1000 = vadd.f32 %v998, %v999
        %v1001 = vrot.slane %v1000, 2
        %v1002 = vadd.f32 %v1000, %v1001
        %v1003 = vrot.slane %v1002, 1
        %v1004 = vadd.f32 %v1002, %v1003
        %v1005 = vadd.f32 %v979, %v983
        %v1006 = vrot.slane %v1005, 4
        %v1007 = vadd.f32 %v1005, %v1006
        %v1008 = vrot.slane %v1007, 2
        %v1009 = vadd.f32 %v1007, %v1008
        %v1010 = vrot.slane %v1009, 1
        %v1011 = vadd.f32 %v1009, %v1010
        %v1012 = vmul.f32 %v990, %v587
        %v1013 = vmul.f32 %v997, %v587
        %v1014 = vmul.f32 %v1004, %v587
        %v1015 = vmul.f32 %v1011, %v587
        %v1016 = vmul.f32 %v972, %v972
        %v1017 = vmul.f32 %v973, %v973
        %v1018 = vmul.f32 %v974, %v974
        %v1019 = vmul.f32 %v975, %v975
        %v1020 = vsub.f32 %v1012, %v1016
        %v1021 = vsub.f32 %v1013, %v1017
        %v1022 = vsub.f32 %v1014, %v1018
        %v1023 = vsub.f32 %v1015, %v1019
        %v1024 = vsub.f32 %v857, %v972
        %v1025 = vsub.f32 %v859, %v973
        %v1026 = vsub.f32 %v934, %v974
        %v1027 = vsub.f32 %v936, %v975
        %v1028 = vsub.f32 %v863, %v972
        %v1029 = vsub.f32 %v865, %v973
        %v1030 = vsub.f32 %v940, %v974
        %v1031 = vsub.f32 %v942, %v975
        %v1032 = vadd.f32 %v1020, 1e-05
        %v1033 = vadd.f32 %v1021, 1e-05
        %v1034 = vadd.f32 %v1022, 1e-05
        %v1035 = vadd.f32 %v1023, 1e-05
        %v1036 = vrsqrt.pop %v1032
        %v1037 = vrsqrt.pop %v1033
        %v1038 = vrsqrt.pop %v1034
        %v1039 = vrsqrt.pop %v1035
        %v1040 = vmul.f32 %v1024, %v1036
        %v1041 = vmul.f32 %v1025, %v1037
        %v1042 = vmul.f32 %v1026, %v1038
        %v1043 = vmul.f32 %v1027, %v1039
        %v1044 = vmul.f32 %v1028, %v1036
        %v1045 = vmul.f32 %v1029, %v1037
        %v1046 = vmul.f32 %v1030, %v1038
        %v1047 = vmul.f32 %v1031, %v1039
        %v1048 = vld [vmem:[#allocation10] sm:$0xf]
        %v1050 = vlaneseq
        %v1051 = vshrl.u32 %v1050, 7
        %v1052 = vsub.s32 0, %v1051
        %v1053 = vrot.slane %v1048, %v1052
        %v1054 = vlaneseq
        %v1055 = vshrl.u32 %v1054, 7
        %v1056 = vsub.s32 1, %v1055
        %v1057 = vrot.slane %v1048, %v1056
        %v1058 = vlaneseq
        %v1059 = vshrl.u32 %v1058, 7
        %v1060 = vsub.s32 2, %v1059
        %v1061 = vrot.slane %v1048, %v1060
        %v1062 = vlaneseq
        %v1063 = vshrl.u32 %v1062, 7
        %v1064 = vsub.s32 3, %v1063
        %v1065 = vrot.slane %v1048, %v1064
        %v1070 = vmul.f32 %v1040, %v1053
        %v1071 = vmul.f32 %v1041, %v1057
        %v1072 = vmul.f32 %v1042, %v1061
        %v1073 = vmul.f32 %v1043, %v1065
        %v1074 = vmul.f32 %v1044, %v1053
        %v1075 = vmul.f32 %v1045, %v1057
        %v1076 = vmul.f32 %v1046, %v1061
        %v1077 = vmul.f32 %v1047, %v1065
        %v1078 = vld [vmem:[#allocation12] sm:$0xf]
        %v1080 = vlaneseq
        %v1081 = vshrl.u32 %v1080, 7
        %v1082 = vsub.s32 0, %v1081
        %v1083 = vrot.slane %v1078, %v1082
        %v1084 = vlaneseq
        %v1085 = vshrl.u32 %v1084, 7
        %v1086 = vsub.s32 1, %v1085
        %v1087 = vrot.slane %v1078, %v1086
        %v1088 = vlaneseq
        %v1089 = vshrl.u32 %v1088, 7
        %v1090 = vsub.s32 2, %v1089
        %v1091 = vrot.slane %v1078, %v1090
        %v1092 = vlaneseq
        %v1093 = vshrl.u32 %v1092, 7
        %v1094 = vsub.s32 3, %v1093
        %v1095 = vrot.slane %v1078, %v1094
        %v1100 = vadd.f32 %v1070, %v1083
        %v1101 = vadd.f32 %v1071, %v1087
        %v1102 = vadd.f32 %v1072, %v1091
        %v1103 = vadd.f32 %v1073, %v1095
        %v1104 = vadd.f32 %v1074, %v1083
        %v1105 = vadd.f32 %v1075, %v1087
        %v1106 = vadd.f32 %v1076, %v1091
        %v1107 = vadd.f32 %v1077, %v1095
        %v1108 = vmax.f32 %v1100, 0.0
        %v1109 = vmax.f32 %v1101, 0.0
        %v1110 = vmax.f32 %v1102, 0.0
        %v1111 = vmax.f32 %v1103, 0.0
        %v1112 = vmax.f32 %v1104, 0.0
        %v1113 = vmax.f32 %v1105, 0.0
        %v1114 = vmax.f32 %v1106, 0.0
        %v1115 = vmax.f32 %v1107, 0.0
        %v1116 = vpack.c.bf16 %v1112, %v1108
        %v1117 = vpack.c.bf16 %v1113, %v1109
        %v1118 = vpack.c.bf16 %v1114, %v1110
        %v1119 = vpack.c.bf16 %v1115, %v1111
        %v1120 = vld [vmem:[%s428] sm:$0xff]
        %v1121 = vld [vmem:[%s428 + $0x8] sm:$0xff]
        %v1122 = vld [vmem:[%s428 + $0x10] sm:$0xff]
        %v1123 = vld [vmem:[%s428 + $0x18] sm:$0xff]
        %v1124 = vld [vmem:[%s428 + $0x20] sm:$0xff]
        %v1125 = vld [vmem:[%s428 + $0x28] sm:$0xff]
        %v1126 = vld [vmem:[%s428 + $0x30] sm:$0xff]
        %v1127 = vld [vmem:[%s428 + $0x38] sm:$0xff]
        %v1128 = vld [vmem:[%s428 + $0x40] sm:$0xff]
        %v1129 = vld [vmem:[%s428 + $0x48] sm:$0xff]
        %v1130 = vld [vmem:[%s428 + $0x50] sm:$0xff]
        %v1131 = vld [vmem:[%s428 + $0x58] sm:$0xff]
        %v1132 = vld [vmem:[%s428 + $0x60] sm:$0xff]
        %v1133 = vld [vmem:[%s428 + $0x68] sm:$0xff]
        %v1134 = vld [vmem:[%s428 + $0x70] sm:$0xff]
        %v1135 = vld [vmem:[%s428 + $0x78] sm:$0xff]
        %v1136 = vld [vmem:[%s428 + $0x80] sm:$0xff]
        %v1137 = vld [vmem:[%s428 + $0x88] sm:$0xff]
        %v1138 = vld [vmem:[%s428 + $0x90] sm:$0xff]
        %v1139 = vld [vmem:[%s428 + $0x98] sm:$0xff]
        %v1140 = vld [vmem:[%s428 + $0xa0] sm:$0xff]
        %v1141 = vld [vmem:[%s428 + $0xa8] sm:$0xff]
        %v1142 = vld [vmem:[%s428 + $0xb0] sm:$0xff]
        %v1143 = vld [vmem:[%s428 + $0xb8] sm:$0xff]
        %v1144 = vld [vmem:[%s428 + $0xc0] sm:$0xff]
        %v1145 = vld [vmem:[%s428 + $0xc8] sm:$0xff]
        %v1146 = vld [vmem:[%s428 + $0xd0] sm:$0xff]
        %v1147 = vld [vmem:[%s428 + $0xd8] sm:$0xff]
        %v1148 = vld [vmem:[%s428 + $0xe0] sm:$0xff]
        %v1149 = vld [vmem:[%s428 + $0xe8] sm:$0xff]
        %v1150 = vld [vmem:[%s428 + $0xf0] sm:$0xff]
        %v1151 = vld [vmem:[%s428 + $0xf8] sm:$0xff]
        %v1152 = vld [vmem:[%s428 + $0x100] sm:$0xff]
        %v1153 = vld [vmem:[%s428 + $0x108] sm:$0xff]
        %v1154 = vld [vmem:[%s428 + $0x110] sm:$0xff]
        %v1155 = vld [vmem:[%s428 + $0x118] sm:$0xff]
        %v1156 = vld [vmem:[%s428 + $0x120] sm:$0xff]
        %v1157 = vld [vmem:[%s428 + $0x128] sm:$0xff]
        %v1158 = vld [vmem:[%s428 + $0x130] sm:$0xff]
        %v1159 = vld [vmem:[%s428 + $0x138] sm:$0xff]
        %v1160 = vld [vmem:[%s428 + $0x140] sm:$0xff]
        %v1161 = vld [vmem:[%s428 + $0x148] sm:$0xff]
        %v1162 = vld [vmem:[%s428 + $0x150] sm:$0xff]
        %v1163 = vld [vmem:[%s428 + $0x158] sm:$0xff]
        %v1164 = vld [vmem:[%s428 + $0x160] sm:$0xff]
        %v1165 = vld [vmem:[%s428 + $0x168] sm:$0xff]
        %v1166 = vld [vmem:[%s428 + $0x170] sm:$0xff]
        %v1167 = vld [vmem:[%s428 + $0x178] sm:$0xff]
        %v1168 = vld [vmem:[%s428 + $0x180] sm:$0xff]
        %v1169 = vld [vmem:[%s428 + $0x188] sm:$0xff]
        %v1170 = vld [vmem:[%s428 + $0x190] sm:$0xff]
        %v1171 = vld [vmem:[%s428 + $0x198] sm:$0xff]
        %v1172 = vld [vmem:[%s428 + $0x1a0] sm:$0xff]
        %v1173 = vld [vmem:[%s428 + $0x1a8] sm:$0xff]
        %v1174 = vld [vmem:[%s428 + $0x1b0] sm:$0xff]
        %v1175 = vld [vmem:[%s428 + $0x1b8] sm:$0xff]
        %v1176 = vld [vmem:[%s428 + $0x1c0] sm:$0xff]
        %v1177 = vld [vmem:[%s428 + $0x1c8] sm:$0xff]
        %v1178 = vld [vmem:[%s428 + $0x1d0] sm:$0xff]
        %v1179 = vld [vmem:[%s428 + $0x1d8] sm:$0xff]
        %v1180 = vld [vmem:[%s428 + $0x1e0] sm:$0xff]
        %v1181 = vld [vmem:[%s428 + $0x1e8] sm:$0xff]
        %v1182 = vld [vmem:[%s428 + $0x1f0] sm:$0xff]
        %v1183 = vld [vmem:[%s428 + $0x1f8] sm:$0xff]
        %v1184 = vld [vmem:[%s428 + $0x200] sm:$0xff]
        %v1185 = vld [vmem:[%s428 + $0x208] sm:$0xff]
        %v1186 = vld [vmem:[%s428 + $0x210] sm:$0xff]
        %v1187 = vld [vmem:[%s428 + $0x218] sm:$0xff]
        %v1188 = vld [vmem:[%s428 + $0x220] sm:$0xff]
        %v1189 = vld [vmem:[%s428 + $0x228] sm:$0xff]
        %v1190 = vld [vmem:[%s428 + $0x230] sm:$0xff]
        %v1191 = vld [vmem:[%s428 + $0x238] sm:$0xff]
        %v1192 = vld [vmem:[%s428 + $0x240] sm:$0xff]
        %v1193 = vld [vmem:[%s428 + $0x248] sm:$0xff]
        %v1194 = vld [vmem:[%s428 + $0x250] sm:$0xff]
        %v1195 = vld [vmem:[%s428 + $0x258] sm:$0xff]
        %v1196 = vld [vmem:[%s428 + $0x260] sm:$0xff]
        %v1197 = vld [vmem:[%s428 + $0x268] sm:$0xff]
        %v1198 = vld [vmem:[%s428 + $0x270] sm:$0xff]
        %v1199 = vld [vmem:[%s428 + $0x278] sm:$0xff]
        %v1200 = vld [vmem:[%s428 + $0x280] sm:$0xff]
        %v1201 = vld [vmem:[%s428 + $0x288] sm:$0xff]
        %v1202 = vld [vmem:[%s428 + $0x290] sm:$0xff]
        %v1203 = vld [vmem:[%s428 + $0x298] sm:$0xff]
        %v1204 = vld [vmem:[%s428 + $0x2a0] sm:$0xff]
        %v1205 = vld [vmem:[%s428 + $0x2a8] sm:$0xff]
        %v1206 = vld [vmem:[%s428 + $0x2b0] sm:$0xff]
        %v1207 = vld [vmem:[%s428 + $0x2b8] sm:$0xff]
        %v1208 = vld [vmem:[%s428 + $0x2c0] sm:$0xff]
        %v1209 = vld [vmem:[%s428 + $0x2c8] sm:$0xff]
        %v1210 = vld [vmem:[%s428 + $0x2d0] sm:$0xff]
        %v1211 = vld [vmem:[%s428 + $0x2d8] sm:$0xff]
        %v1212 = vld [vmem:[%s428 + $0x2e0] sm:$0xff]
        %v1213 = vld [vmem:[%s428 + $0x2e8] sm:$0xff]
        %v1214 = vld [vmem:[%s428 + $0x2f0] sm:$0xff]
        %v1215 = vld [vmem:[%s428 + $0x2f8] sm:$0xff]
        %v1216 = vld [vmem:[%s428 + $0x300] sm:$0xff]
        %v1217 = vld [vmem:[%s428 + $0x308] sm:$0xff]
        %v1218 = vld [vmem:[%s428 + $0x310] sm:$0xff]
        %v1219 = vld [vmem:[%s428 + $0x318] sm:$0xff]
        %v1220 = vld [vmem:[%s428 + $0x320] sm:$0xff]
        %v1221 = vld [vmem:[%s428 + $0x328] sm:$0xff]
        %v1222 = vld [vmem:[%s428 + $0x330] sm:$0xff]
        %v1223 = vld [vmem:[%s428 + $0x338] sm:$0xff]
        %v1224 = vld [vmem:[%s428 + $0x340] sm:$0xff]
        %v1225 = vld [vmem:[%s428 + $0x348] sm:$0xff]
        %v1226 = vld [vmem:[%s428 + $0x350] sm:$0xff]
        %v1227 = vld [vmem:[%s428 + $0x358] sm:$0xff]
        %v1228 = vld [vmem:[%s428 + $0x360] sm:$0xff]
        %v1229 = vld [vmem:[%s428 + $0x368] sm:$0xff]
        %v1230 = vld [vmem:[%s428 + $0x370] sm:$0xff]
        %v1231 = vld [vmem:[%s428 + $0x378] sm:$0xff]
        %v1232 = vld [vmem:[%s428 + $0x380] sm:$0xff]
        %v1233 = vld [vmem:[%s428 + $0x388] sm:$0xff]
        %v1234 = vld [vmem:[%s428 + $0x390] sm:$0xff]
        %v1235 = vld [vmem:[%s428 + $0x398] sm:$0xff]
        %v1236 = vld [vmem:[%s428 + $0x3a0] sm:$0xff]
        %v1237 = vld [vmem:[%s428 + $0x3a8] sm:$0xff]
        %v1238 = vld [vmem:[%s428 + $0x3b0] sm:$0xff]
        %v1239 = vld [vmem:[%s428 + $0x3b8] sm:$0xff]
        %v1240 = vld [vmem:[%s428 + $0x3c0] sm:$0xff]
        %v1241 = vld [vmem:[%s428 + $0x3c8] sm:$0xff]
        %v1242 = vld [vmem:[%s428 + $0x3d0] sm:$0xff]
        %v1243 = vld [vmem:[%s428 + $0x3d8] sm:$0xff]
        %v1244 = vld [vmem:[%s428 + $0x3e0] sm:$0xff]
        %v1245 = vld [vmem:[%s428 + $0x3e8] sm:$0xff]
        %v1246 = vld [vmem:[%s428 + $0x3f0] sm:$0xff]
        %v1247 = vld [vmem:[%s428 + $0x3f8] sm:$0xff]
        %v1248 = vld [vmem:[%s428 + $0x400] sm:$0xff]
        %v1249 = vld [vmem:[%s428 + $0x408] sm:$0xff]
        %v1250 = vld [vmem:[%s428 + $0x410] sm:$0xff]
        %v1251 = vld [vmem:[%s428 + $0x418] sm:$0xff]
        %v1252 = vld [vmem:[%s428 + $0x420] sm:$0xff]
        %v1253 = vld [vmem:[%s428 + $0x428] sm:$0xff]
        %v1254 = vld [vmem:[%s428 + $0x430] sm:$0xff]
        %v1255 = vld [vmem:[%s428 + $0x438] sm:$0xff]
        %v1256 = vld [vmem:[%s428 + $0x440] sm:$0xff]
        %v1257 = vld [vmem:[%s428 + $0x448] sm:$0xff]
        %v1258 = vld [vmem:[%s428 + $0x450] sm:$0xff]
        %v1259 = vld [vmem:[%s428 + $0x458] sm:$0xff]
        %v1260 = vld [vmem:[%s428 + $0x460] sm:$0xff]
        %v1261 = vld [vmem:[%s428 + $0x468] sm:$0xff]
        %v1262 = vld [vmem:[%s428 + $0x470] sm:$0xff]
        %v1263 = vld [vmem:[%s428 + $0x478] sm:$0xff]
        %v1264 = vld [vmem:[%s428 + $0x480] sm:$0xff]
        %v1265 = vld [vmem:[%s428 + $0x488] sm:$0xff]
        %v1266 = vld [vmem:[%s428 + $0x490] sm:$0xff]
        %v1267 = vld [vmem:[%s428 + $0x498] sm:$0xff]
        %v1268 = vld [vmem:[%s428 + $0x4a0] sm:$0xff]
        %v1269 = vld [vmem:[%s428 + $0x4a8] sm:$0xff]
        %v1270 = vld [vmem:[%s428 + $0x4b0] sm:$0xff]
        %v1271 = vld [vmem:[%s428 + $0x4b8] sm:$0xff]
        %v1272 = vld [vmem:[%s428 + $0x4c0] sm:$0xff]
        %v1273 = vld [vmem:[%s428 + $0x4c8] sm:$0xff]
        %v1274 = vld [vmem:[%s428 + $0x4d0] sm:$0xff]
        %v1275 = vld [vmem:[%s428 + $0x4d8] sm:$0xff]
        %v1276 = vld [vmem:[%s428 + $0x4e0] sm:$0xff]
        %v1277 = vld [vmem:[%s428 + $0x4e8] sm:$0xff]
        %v1278 = vld [vmem:[%s428 + $0x4f0] sm:$0xff]
        %v1279 = vld [vmem:[%s428 + $0x4f8] sm:$0xff]
        %v1280 = vld [vmem:[%s428 + $0x500] sm:$0xff]
        %v1281 = vld [vmem:[%s428 + $0x508] sm:$0xff]
        %v1282 = vld [vmem:[%s428 + $0x510] sm:$0xff]
        %v1283 = vld [vmem:[%s428 + $0x518] sm:$0xff]
        %v1284 = vld [vmem:[%s428 + $0x520] sm:$0xff]
        %v1285 = vld [vmem:[%s428 + $0x528] sm:$0xff]
        %v1286 = vld [vmem:[%s428 + $0x530] sm:$0xff]
        %v1287 = vld [vmem:[%s428 + $0x538] sm:$0xff]
        %v1288 = vld [vmem:[%s428 + $0x540] sm:$0xff]
        %v1289 = vld [vmem:[%s428 + $0x548] sm:$0xff]
        %v1290 = vld [vmem:[%s428 + $0x550] sm:$0xff]
        %v1291 = vld [vmem:[%s428 + $0x558] sm:$0xff]
        %v1292 = vld [vmem:[%s428 + $0x560] sm:$0xff]
        %v1293 = vld [vmem:[%s428 + $0x568] sm:$0xff]
        %v1294 = vld [vmem:[%s428 + $0x570] sm:$0xff]
        %v1295 = vld [vmem:[%s428 + $0x578] sm:$0xff]
        %v1296 = vld [vmem:[%s428 + $0x580] sm:$0xff]
        %v1297 = vld [vmem:[%s428 + $0x588] sm:$0xff]
        %v1298 = vld [vmem:[%s428 + $0x590] sm:$0xff]
        %v1299 = vld [vmem:[%s428 + $0x598] sm:$0xff]
        %v1300 = vld [vmem:[%s428 + $0x5a0] sm:$0xff]
        %v1301 = vld [vmem:[%s428 + $0x5a8] sm:$0xff]
        %v1302 = vld [vmem:[%s428 + $0x5b0] sm:$0xff]
        %v1303 = vld [vmem:[%s428 + $0x5b8] sm:$0xff]
        %v1304 = vld [vmem:[%s428 + $0x5c0] sm:$0xff]
        %v1305 = vld [vmem:[%s428 + $0x5c8] sm:$0xff]
        %v1306 = vld [vmem:[%s428 + $0x5d0] sm:$0xff]
        %v1307 = vld [vmem:[%s428 + $0x5d8] sm:$0xff]
        %v1308 = vld [vmem:[%s428 + $0x5e0] sm:$0xff]
        %v1309 = vld [vmem:[%s428 + $0x5e8] sm:$0xff]
        %v1310 = vld [vmem:[%s428 + $0x5f0] sm:$0xff]
        %v1311 = vld [vmem:[%s428 + $0x5f8] sm:$0xff]
        %v1312 = vld [vmem:[%s428 + $0x600] sm:$0xff]
        %v1313 = vld [vmem:[%s428 + $0x608] sm:$0xff]
        %v1314 = vld [vmem:[%s428 + $0x610] sm:$0xff]
        %v1315 = vld [vmem:[%s428 + $0x618] sm:$0xff]
        %v1316 = vld [vmem:[%s428 + $0x620] sm:$0xff]
        %v1317 = vld [vmem:[%s428 + $0x628] sm:$0xff]
        %v1318 = vld [vmem:[%s428 + $0x630] sm:$0xff]
        %v1319 = vld [vmem:[%s428 + $0x638] sm:$0xff]
        %v1320 = vld [vmem:[%s428 + $0x640] sm:$0xff]
        %v1321 = vld [vmem:[%s428 + $0x648] sm:$0xff]
        %v1322 = vld [vmem:[%s428 + $0x650] sm:$0xff]
        %v1323 = vld [vmem:[%s428 + $0x658] sm:$0xff]
        %v1324 = vld [vmem:[%s428 + $0x660] sm:$0xff]
        %v1325 = vld [vmem:[%s428 + $0x668] sm:$0xff]
        %v1326 = vld [vmem:[%s428 + $0x670] sm:$0xff]
        %v1327 = vld [vmem:[%s428 + $0x678] sm:$0xff]
        %v1328 = vld [vmem:[%s428 + $0x680] sm:$0xff]
        %v1329 = vld [vmem:[%s428 + $0x688] sm:$0xff]
        %v1330 = vld [vmem:[%s428 + $0x690] sm:$0xff]
        %v1331 = vld [vmem:[%s428 + $0x698] sm:$0xff]
        %v1332 = vld [vmem:[%s428 + $0x6a0] sm:$0xff]
        %v1333 = vld [vmem:[%s428 + $0x6a8] sm:$0xff]
        %v1334 = vld [vmem:[%s428 + $0x6b0] sm:$0xff]
        %v1335 = vld [vmem:[%s428 + $0x6b8] sm:$0xff]
        %v1336 = vld [vmem:[%s428 + $0x6c0] sm:$0xff]
        %v1337 = vld [vmem:[%s428 + $0x6c8] sm:$0xff]
        %v1338 = vld [vmem:[%s428 + $0x6d0] sm:$0xff]
        %v1339 = vld [vmem:[%s428 + $0x6d8] sm:$0xff]
        %v1340 = vld [vmem:[%s428 + $0x6e0] sm:$0xff]
        %v1341 = vld [vmem:[%s428 + $0x6e8] sm:$0xff]
        %v1342 = vld [vmem:[%s428 + $0x6f0] sm:$0xff]
        %v1343 = vld [vmem:[%s428 + $0x6f8] sm:$0xff]
        %v1344 = vld [vmem:[%s428 + $0x700] sm:$0xff]
        %v1345 = vld [vmem:[%s428 + $0x708] sm:$0xff]
        %v1346 = vld [vmem:[%s428 + $0x710] sm:$0xff]
        %v1347 = vld [vmem:[%s428 + $0x718] sm:$0xff]
        %v1348 = vld [vmem:[%s428 + $0x720] sm:$0xff]
        %v1349 = vld [vmem:[%s428 + $0x728] sm:$0xff]
        %v1350 = vld [vmem:[%s428 + $0x730] sm:$0xff]
        %v1351 = vld [vmem:[%s428 + $0x738] sm:$0xff]
        %v1352 = vld [vmem:[%s428 + $0x740] sm:$0xff]
        %v1353 = vld [vmem:[%s428 + $0x748] sm:$0xff]
        %v1354 = vld [vmem:[%s428 + $0x750] sm:$0xff]
        %v1355 = vld [vmem:[%s428 + $0x758] sm:$0xff]
        %v1356 = vld [vmem:[%s428 + $0x760] sm:$0xff]
        %v1357 = vld [vmem:[%s428 + $0x768] sm:$0xff]
        %v1358 = vld [vmem:[%s428 + $0x770] sm:$0xff]
        %v1359 = vld [vmem:[%s428 + $0x778] sm:$0xff]
        %v1360 = vld [vmem:[%s428 + $0x780] sm:$0xff]
        %v1361 = vld [vmem:[%s428 + $0x788] sm:$0xff]
        %v1362 = vld [vmem:[%s428 + $0x790] sm:$0xff]
        %v1363 = vld [vmem:[%s428 + $0x798] sm:$0xff]
        %v1364 = vld [vmem:[%s428 + $0x7a0] sm:$0xff]
        %v1365 = vld [vmem:[%s428 + $0x7a8] sm:$0xff]
        %v1366 = vld [vmem:[%s428 + $0x7b0] sm:$0xff]
        %v1367 = vld [vmem:[%s428 + $0x7b8] sm:$0xff]
        %v1368 = vld [vmem:[%s428 + $0x7c0] sm:$0xff]
        %v1369 = vld [vmem:[%s428 + $0x7c8] sm:$0xff]
        %v1370 = vld [vmem:[%s428 + $0x7d0] sm:$0xff]
        %v1371 = vld [vmem:[%s428 + $0x7d8] sm:$0xff]
        %v1372 = vld [vmem:[%s428 + $0x7e0] sm:$0xff]
        %v1373 = vld [vmem:[%s428 + $0x7e8] sm:$0xff]
        %v1374 = vld [vmem:[%s428 + $0x7f0] sm:$0xff]
        %v1375 = vld [vmem:[%s428 + $0x7f8] sm:$0xff]
        %v1376 = vld [vmem:[%s437] sm:$0xff]
        %v1378 = vlaneseq
        %v1379 = vshrl.u32 %v1378, 7
        %v1380 = vsub.s32 0, %v1379
        %v1381 = vrot.slane %v1376, %v1380
        %v1382 = vlaneseq
        %v1383 = vshrl.u32 %v1382, 7
        %v1384 = vsub.s32 1, %v1383
        %v1385 = vrot.slane %v1376, %v1384
        %v1386 = vlaneseq
        %v1387 = vshrl.u32 %v1386, 7
        %v1388 = vsub.s32 2, %v1387
        %v1389 = vrot.slane %v1376, %v1388
        %v1390 = vlaneseq
        %v1391 = vshrl.u32 %v1390, 7
        %v1392 = vsub.s32 3, %v1391
        %v1393 = vrot.slane %v1376, %v1392
        %v1394 = vlaneseq
        %v1395 = vshrl.u32 %v1394, 7
        %v1396 = vsub.s32 4, %v1395
        %v1397 = vrot.slane %v1376, %v1396
        %v1398 = vlaneseq
        %v1399 = vshrl.u32 %v1398, 7
        %v1400 = vsub.s32 5, %v1399
        %v1401 = vrot.slane %v1376, %v1400
        %v1402 = vlaneseq
        %v1403 = vshrl.u32 %v1402, 7
        %v1404 = vsub.s32 6, %v1403
        %v1405 = vrot.slane %v1376, %v1404
        %v1406 = vlaneseq
        %v1407 = vshrl.u32 %v1406, 7
        %v1408 = vsub.s32 7, %v1407
        %v1409 = vrot.slane %v1376, %v1408
        %v1674 = vunpack.c.l.b16 %v1120
        %v1675 = vunpack.c.h.b16 %v1120
        %v1676 = vunpack.c.l.b16 %v1121
        %v1677 = vunpack.c.h.b16 %v1121
        %v1678 = vunpack.c.l.b16 %v1122
        %v1679 = vunpack.c.h.b16 %v1122
        %v1680 = vunpack.c.l.b16 %v1123
        %v1681 = vunpack.c.h.b16 %v1123
        %v1682 = vunpack.c.l.b16 %v1124
        %v1683 = vunpack.c.h.b16 %v1124
        %v1684 = vunpack.c.l.b16 %v1125
        %v1685 = vunpack.c.h.b16 %v1125
        %v1686 = vunpack.c.l.b16 %v1126
        %v1687 = vunpack.c.h.b16 %v1126
        %v1688 = vunpack.c.l.b16 %v1127
        %v1689 = vunpack.c.h.b16 %v1127
        %v1690 = vunpack.c.l.b16 %v1128
        %v1691 = vunpack.c.h.b16 %v1128
        %v1692 = vunpack.c.l.b16 %v1129
        %v1693 = vunpack.c.h.b16 %v1129
        %v1694 = vunpack.c.l.b16 %v1130
        %v1695 = vunpack.c.h.b16 %v1130
        %v1696 = vunpack.c.l.b16 %v1131
        %v1697 = vunpack.c.h.b16 %v1131
        %v1698 = vunpack.c.l.b16 %v1132
        %v1699 = vunpack.c.h.b16 %v1132
        %v1700 = vunpack.c.l.b16 %v1133
        %v1701 = vunpack.c.h.b16 %v1133
        %v1702 = vunpack.c.l.b16 %v1134
        %v1703 = vunpack.c.h.b16 %v1134
        %v1704 = vunpack.c.l.b16 %v1135
        %v1705 = vunpack.c.h.b16 %v1135
        %v1706 = vunpack.c.l.b16 %v1136
        %v1707 = vunpack.c.h.b16 %v1136
        %v1708 = vunpack.c.l.b16 %v1137
        %v1709 = vunpack.c.h.b16 %v1137
        %v1710 = vunpack.c.l.b16 %v1138
        %v1711 = vunpack.c.h.b16 %v1138
        %v1712 = vunpack.c.l.b16 %v1139
        %v1713 = vunpack.c.h.b16 %v1139
        %v1714 = vunpack.c.l.b16 %v1140
        %v1715 = vunpack.c.h.b16 %v1140
        %v1716 = vunpack.c.l.b16 %v1141
        %v1717 = vunpack.c.h.b16 %v1141
        %v1718 = vunpack.c.l.b16 %v1142
        %v1719 = vunpack.c.h.b16 %v1142
        %v1720 = vunpack.c.l.b16 %v1143
        %v1721 = vunpack.c.h.b16 %v1143
        %v1722 = vunpack.c.l.b16 %v1144
        %v1723 = vunpack.c.h.b16 %v1144
        %v1724 = vunpack.c.l.b16 %v1145
        %v1725 = vunpack.c.h.b16 %v1145
        %v1726 = vunpack.c.l.b16 %v1146
        %v1727 = vunpack.c.h.b16 %v1146
        %v1728 = vunpack.c.l.b16 %v1147
        %v1729 = vunpack.c.h.b16 %v1147
        %v1730 = vunpack.c.l.b16 %v1148
        %v1731 = vunpack.c.h.b16 %v1148
        %v1732 = vunpack.c.l.b16 %v1149
        %v1733 = vunpack.c.h.b16 %v1149
        %v1734 = vunpack.c.l.b16 %v1150
        %v1735 = vunpack.c.h.b16 %v1150
        %v1736 = vunpack.c.l.b16 %v1151
        %v1737 = vunpack.c.h.b16 %v1151
        %v1738 = vunpack.c.l.b16 %v1152
        %v1739 = vunpack.c.h.b16 %v1152
        %v1740 = vunpack.c.l.b16 %v1153
        %v1741 = vunpack.c.h.b16 %v1153
        %v1742 = vunpack.c.l.b16 %v1154
        %v1743 = vunpack.c.h.b16 %v1154
        %v1744 = vunpack.c.l.b16 %v1155
        %v1745 = vunpack.c.h.b16 %v1155
        %v1746 = vunpack.c.l.b16 %v1156
        %v1747 = vunpack.c.h.b16 %v1156
        %v1748 = vunpack.c.l.b16 %v1157
        %v1749 = vunpack.c.h.b16 %v1157
        %v1750 = vunpack.c.l.b16 %v1158
        %v1751 = vunpack.c.h.b16 %v1158
        %v1752 = vunpack.c.l.b16 %v1159
        %v1753 = vunpack.c.h.b16 %v1159
        %v1754 = vunpack.c.l.b16 %v1160
        %v1755 = vunpack.c.h.b16 %v1160
        %v1756 = vunpack.c.l.b16 %v1161
        %v1757 = vunpack.c.h.b16 %v1161
        %v1758 = vunpack.c.l.b16 %v1162
        %v1759 = vunpack.c.h.b16 %v1162
        %v1760 = vunpack.c.l.b16 %v1163
        %v1761 = vunpack.c.h.b16 %v1163
        %v1762 = vunpack.c.l.b16 %v1164
        %v1763 = vunpack.c.h.b16 %v1164
        %v1764 = vunpack.c.l.b16 %v1165
        %v1765 = vunpack.c.h.b16 %v1165
        %v1766 = vunpack.c.l.b16 %v1166
        %v1767 = vunpack.c.h.b16 %v1166
        %v1768 = vunpack.c.l.b16 %v1167
        %v1769 = vunpack.c.h.b16 %v1167
        %v1770 = vunpack.c.l.b16 %v1168
        %v1771 = vunpack.c.h.b16 %v1168
        %v1772 = vunpack.c.l.b16 %v1169
        %v1773 = vunpack.c.h.b16 %v1169
        %v1774 = vunpack.c.l.b16 %v1170
        %v1775 = vunpack.c.h.b16 %v1170
        %v1776 = vunpack.c.l.b16 %v1171
        %v1777 = vunpack.c.h.b16 %v1171
        %v1778 = vunpack.c.l.b16 %v1172
        %v1779 = vunpack.c.h.b16 %v1172
        %v1780 = vunpack.c.l.b16 %v1173
        %v1781 = vunpack.c.h.b16 %v1173
        %v1782 = vunpack.c.l.b16 %v1174
        %v1783 = vunpack.c.h.b16 %v1174
        %v1784 = vunpack.c.l.b16 %v1175
        %v1785 = vunpack.c.h.b16 %v1175
        %v1786 = vunpack.c.l.b16 %v1176
        %v1787 = vunpack.c.h.b16 %v1176
        %v1788 = vunpack.c.l.b16 %v1177
        %v1789 = vunpack.c.h.b16 %v1177
        %v1790 = vunpack.c.l.b16 %v1178
        %v1791 = vunpack.c.h.b16 %v1178
        %v1792 = vunpack.c.l.b16 %v1179
        %v1793 = vunpack.c.h.b16 %v1179
        %v1794 = vunpack.c.l.b16 %v1180
        %v1795 = vunpack.c.h.b16 %v1180
        %v1796 = vunpack.c.l.b16 %v1181
        %v1797 = vunpack.c.h.b16 %v1181
        %v1798 = vunpack.c.l.b16 %v1182
        %v1799 = vunpack.c.h.b16 %v1182
        %v1800 = vunpack.c.l.b16 %v1183
        %v1801 = vunpack.c.h.b16 %v1183
        %v1802 = vunpack.c.l.b16 %v1184
        %v1803 = vunpack.c.h.b16 %v1184
        %v1804 = vunpack.c.l.b16 %v1185
        %v1805 = vunpack.c.h.b16 %v1185
        %v1806 = vunpack.c.l.b16 %v1186
        %v1807 = vunpack.c.h.b16 %v1186
        %v1808 = vunpack.c.l.b16 %v1187
        %v1809 = vunpack.c.h.b16 %v1187
        %v1810 = vunpack.c.l.b16 %v1188
        %v1811 = vunpack.c.h.b16 %v1188
        %v1812 = vunpack.c.l.b16 %v1189
        %v1813 = vunpack.c.h.b16 %v1189
        %v1814 = vunpack.c.l.b16 %v1190
        %v1815 = vunpack.c.h.b16 %v1190
        %v1816 = vunpack.c.l.b16 %v1191
        %v1817 = vunpack.c.h.b16 %v1191
        %v1818 = vunpack.c.l.b16 %v1192
        %v1819 = vunpack.c.h.b16 %v1192
        %v1820 = vunpack.c.l.b16 %v1193
        %v1821 = vunpack.c.h.b16 %v1193
        %v1822 = vunpack.c.l.b16 %v1194
        %v1823 = vunpack.c.h.b16 %v1194
        %v1824 = vunpack.c.l.b16 %v1195
        %v1825 = vunpack.c.h.b16 %v1195
        %v1826 = vunpack.c.l.b16 %v1196
        %v1827 = vunpack.c.h.b16 %v1196
        %v1828 = vunpack.c.l.b16 %v1197
        %v1829 = vunpack.c.h.b16 %v1197
        %v1830 = vunpack.c.l.b16 %v1198
        %v1831 = vunpack.c.h.b16 %v1198
        %v1832 = vunpack.c.l.b16 %v1199
        %v1833 = vunpack.c.h.b16 %v1199
        %v1834 = vunpack.c.l.b16 %v1200
        %v1835 = vunpack.c.h.b16 %v1200
        %v1836 = vunpack.c.l.b16 %v1201
        %v1837 = vunpack.c.h.b16 %v1201
        %v1838 = vunpack.c.l.b16 %v1202
        %v1839 = vunpack.c.h.b16 %v1202
        %v1840 = vunpack.c.l.b16 %v1203
        %v1841 = vunpack.c.h.b16 %v1203
        %v1842 = vunpack.c.l.b16 %v1204
        %v1843 = vunpack.c.h.b16 %v1204
        %v1844 = vunpack.c.l.b16 %v1205
        %v1845 = vunpack.c.h.b16 %v1205
        %v1846 = vunpack.c.l.b16 %v1206
        %v1847 = vunpack.c.h.b16 %v1206
        %v1848 = vunpack.c.l.b16 %v1207
        %v1849 = vunpack.c.h.b16 %v1207
        %v1850 = vunpack.c.l.b16 %v1208
        %v1851 = vunpack.c.h.b16 %v1208
        %v1852 = vunpack.c.l.b16 %v1209
        %v1853 = vunpack.c.h.b16 %v1209
        %v1854 = vunpack.c.l.b16 %v1210
        %v1855 = vunpack.c.h.b16 %v1210
        %v1856 = vunpack.c.l.b16 %v1211
        %v1857 = vunpack.c.h.b16 %v1211
        %v1858 = vunpack.c.l.b16 %v1212
        %v1859 = vunpack.c.h.b16 %v1212
        %v1860 = vunpack.c.l.b16 %v1213
        %v1861 = vunpack.c.h.b16 %v1213
        %v1862 = vunpack.c.l.b16 %v1214
        %v1863 = vunpack.c.h.b16 %v1214
        %v1864 = vunpack.c.l.b16 %v1215
        %v1865 = vunpack.c.h.b16 %v1215
        %v1866 = vunpack.c.l.b16 %v1216
        %v1867 = vunpack.c.h.b16 %v1216
        %v1868 = vunpack.c.l.b16 %v1217
        %v1869 = vunpack.c.h.b16 %v1217
        %v1870 = vunpack.c.l.b16 %v1218
        %v1871 = vunpack.c.h.b16 %v1218
        %v1872 = vunpack.c.l.b16 %v1219
        %v1873 = vunpack.c.h.b16 %v1219
        %v1874 = vunpack.c.l.b16 %v1220
        %v1875 = vunpack.c.h.b16 %v1220
        %v1876 = vunpack.c.l.b16 %v1221
        %v1877 = vunpack.c.h.b16 %v1221
        %v1878 = vunpack.c.l.b16 %v1222
        %v1879 = vunpack.c.h.b16 %v1222
        %v1880 = vunpack.c.l.b16 %v1223
        %v1881 = vunpack.c.h.b16 %v1223
        %v1882 = vunpack.c.l.b16 %v1224
        %v1883 = vunpack.c.h.b16 %v1224
        %v1884 = vunpack.c.l.b16 %v1225
        %v1885 = vunpack.c.h.b16 %v1225
        %v1886 = vunpack.c.l.b16 %v1226
        %v1887 = vunpack.c.h.b16 %v1226
        %v1888 = vunpack.c.l.b16 %v1227
        %v1889 = vunpack.c.h.b16 %v1227
        %v1890 = vunpack.c.l.b16 %v1228
        %v1891 = vunpack.c.h.b16 %v1228
        %v1892 = vunpack.c.l.b16 %v1229
        %v1893 = vunpack.c.h.b16 %v1229
        %v1894 = vunpack.c.l.b16 %v1230
        %v1895 = vunpack.c.h.b16 %v1230
        %v1896 = vunpack.c.l.b16 %v1231
        %v1897 = vunpack.c.h.b16 %v1231
        %v1898 = vunpack.c.l.b16 %v1232
        %v1899 = vunpack.c.h.b16 %v1232
        %v1900 = vunpack.c.l.b16 %v1233
        %v1901 = vunpack.c.h.b16 %v1233
        %v1902 = vunpack.c.l.b16 %v1234
        %v1903 = vunpack.c.h.b16 %v1234
        %v1904 = vunpack.c.l.b16 %v1235
        %v1905 = vunpack.c.h.b16 %v1235
        %v1906 = vunpack.c.l.b16 %v1236
        %v1907 = vunpack.c.h.b16 %v1236
        %v1908 = vunpack.c.l.b16 %v1237
        %v1909 = vunpack.c.h.b16 %v1237
        %v1910 = vunpack.c.l.b16 %v1238
        %v1911 = vunpack.c.h.b16 %v1238
        %v1912 = vunpack.c.l.b16 %v1239
        %v1913 = vunpack.c.h.b16 %v1239
        %v1914 = vunpack.c.l.b16 %v1240
        %v1915 = vunpack.c.h.b16 %v1240
        %v1916 = vunpack.c.l.b16 %v1241
        %v1917 = vunpack.c.h.b16 %v1241
        %v1918 = vunpack.c.l.b16 %v1242
        %v1919 = vunpack.c.h.b16 %v1242
        %v1920 = vunpack.c.l.b16 %v1243
        %v1921 = vunpack.c.h.b16 %v1243
        %v1922 = vunpack.c.l.b16 %v1244
        %v1923 = vunpack.c.h.b16 %v1244
        %v1924 = vunpack.c.l.b16 %v1245
        %v1925 = vunpack.c.h.b16 %v1245
        %v1926 = vunpack.c.l.b16 %v1246
        %v1927 = vunpack.c.h.b16 %v1246
        %v1928 = vunpack.c.l.b16 %v1247
        %v1929 = vunpack.c.h.b16 %v1247
        %v1930 = vunpack.c.l.b16 %v1248
        %v1931 = vunpack.c.h.b16 %v1248
        %v1932 = vunpack.c.l.b16 %v1249
        %v1933 = vunpack.c.h.b16 %v1249
        %v1934 = vunpack.c.l.b16 %v1250
        %v1935 = vunpack.c.h.b16 %v1250
        %v1936 = vunpack.c.l.b16 %v1251
        %v1937 = vunpack.c.h.b16 %v1251
        %v1938 = vunpack.c.l.b16 %v1252
        %v1939 = vunpack.c.h.b16 %v1252
        %v1940 = vunpack.c.l.b16 %v1253
        %v1941 = vunpack.c.h.b16 %v1253
        %v1942 = vunpack.c.l.b16 %v1254
        %v1943 = vunpack.c.h.b16 %v1254
        %v1944 = vunpack.c.l.b16 %v1255
        %v1945 = vunpack.c.h.b16 %v1255
        %v1946 = vunpack.c.l.b16 %v1256
        %v1947 = vunpack.c.h.b16 %v1256
        %v1948 = vunpack.c.l.b16 %v1257
        %v1949 = vunpack.c.h.b16 %v1257
        %v1950 = vunpack.c.l.b16 %v1258
        %v1951 = vunpack.c.h.b16 %v1258
        %v1952 = vunpack.c.l.b16 %v1259
        %v1953 = vunpack.c.h.b16 %v1259
        %v1954 = vunpack.c.l.b16 %v1260
        %v1955 = vunpack.c.h.b16 %v1260
        %v1956 = vunpack.c.l.b16 %v1261
        %v1957 = vunpack.c.h.b16 %v1261
        %v1958 = vunpack.c.l.b16 %v1262
        %v1959 = vunpack.c.h.b16 %v1262
        %v1960 = vunpack.c.l.b16 %v1263
        %v1961 = vunpack.c.h.b16 %v1263
        %v1962 = vunpack.c.l.b16 %v1264
        %v1963 = vunpack.c.h.b16 %v1264
        %v1964 = vunpack.c.l.b16 %v1265
        %v1965 = vunpack.c.h.b16 %v1265
        %v1966 = vunpack.c.l.b16 %v1266
        %v1967 = vunpack.c.h.b16 %v1266
        %v1968 = vunpack.c.l.b16 %v1267
        %v1969 = vunpack.c.h.b16 %v1267
        %v1970 = vunpack.c.l.b16 %v1268
        %v1971 = vunpack.c.h.b16 %v1268
        %v1972 = vunpack.c.l.b16 %v1269
        %v1973 = vunpack.c.h.b16 %v1269
        %v1974 = vunpack.c.l.b16 %v1270
        %v1975 = vunpack.c.h.b16 %v1270
        %v1976 = vunpack.c.l.b16 %v1271
        %v1977 = vunpack.c.h.b16 %v1271
        %v1978 = vunpack.c.l.b16 %v1272
        %v1979 = vunpack.c.h.b16 %v1272
        %v1980 = vunpack.c.l.b16 %v1273
        %v1981 = vunpack.c.h.b16 %v1273
        %v1982 = vunpack.c.l.b16 %v1274
        %v1983 = vunpack.c.h.b16 %v1274
        %v1984 = vunpack.c.l.b16 %v1275
        %v1985 = vunpack.c.h.b16 %v1275
        %v1986 = vunpack.c.l.b16 %v1276
        %v1987 = vunpack.c.h.b16 %v1276
        %v1988 = vunpack.c.l.b16 %v1277
        %v1989 = vunpack.c.h.b16 %v1277
        %v1990 = vunpack.c.l.b16 %v1278
        %v1991 = vunpack.c.h.b16 %v1278
        %v1992 = vunpack.c.l.b16 %v1279
        %v1993 = vunpack.c.h.b16 %v1279
        %v1994 = vunpack.c.l.b16 %v1280
        %v1995 = vunpack.c.h.b16 %v1280
        %v1996 = vunpack.c.l.b16 %v1281
        %v1997 = vunpack.c.h.b16 %v1281
        %v1998 = vunpack.c.l.b16 %v1282
        %v1999 = vunpack.c.h.b16 %v1282
        %v2000 = vunpack.c.l.b16 %v1283
        %v2001 = vunpack.c.h.b16 %v1283
        %v2002 = vunpack.c.l.b16 %v1284
        %v2003 = vunpack.c.h.b16 %v1284
        %v2004 = vunpack.c.l.b16 %v1285
        %v2005 = vunpack.c.h.b16 %v1285
        %v2006 = vunpack.c.l.b16 %v1286
        %v2007 = vunpack.c.h.b16 %v1286
        %v2008 = vunpack.c.l.b16 %v1287
        %v2009 = vunpack.c.h.b16 %v1287
        %v2010 = vunpack.c.l.b16 %v1288
        %v2011 = vunpack.c.h.b16 %v1288
        %v2012 = vunpack.c.l.b16 %v1289
        %v2013 = vunpack.c.h.b16 %v1289
        %v2014 = vunpack.c.l.b16 %v1290
        %v2015 = vunpack.c.h.b16 %v1290
        %v2016 = vunpack.c.l.b16 %v1291
        %v2017 = vunpack.c.h.b16 %v1291
        %v2018 = vunpack.c.l.b16 %v1292
        %v2019 = vunpack.c.h.b16 %v1292
        %v2020 = vunpack.c.l.b16 %v1293
        %v2021 = vunpack.c.h.b16 %v1293
        %v2022 = vunpack.c.l.b16 %v1294
        %v2023 = vunpack.c.h.b16 %v1294
        %v2024 = vunpack.c.l.b16 %v1295
        %v2025 = vunpack.c.h.b16 %v1295
        %v2026 = vunpack.c.l.b16 %v1296
        %v2027 = vunpack.c.h.b16 %v1296
        %v2028 = vunpack.c.l.b16 %v1297
        %v2029 = vunpack.c.h.b16 %v1297
        %v2030 = vunpack.c.l.b16 %v1298
        %v2031 = vunpack.c.h.b16 %v1298
        %v2032 = vunpack.c.l.b16 %v1299
        %v2033 = vunpack.c.h.b16 %v1299
        %v2034 = vunpack.c.l.b16 %v1300
        %v2035 = vunpack.c.h.b16 %v1300
        %v2036 = vunpack.c.l.b16 %v1301
        %v2037 = vunpack.c.h.b16 %v1301
        %v2038 = vunpack.c.l.b16 %v1302
        %v2039 = vunpack.c.h.b16 %v1302
        %v2040 = vunpack.c.l.b16 %v1303
        %v2041 = vunpack.c.h.b16 %v1303
        %v2042 = vunpack.c.l.b16 %v1304
        %v2043 = vunpack.c.h.b16 %v1304
        %v2044 = vunpack.c.l.b16 %v1305
        %v2045 = vunpack.c.h.b16 %v1305
        %v2046 = vunpack.c.l.b16 %v1306
        %v2047 = vunpack.c.h.b16 %v1306
        %v2048 = vunpack.c.l.b16 %v1307
        %v2049 = vunpack.c.h.b16 %v1307
        %v2050 = vunpack.c.l.b16 %v1308
        %v2051 = vunpack.c.h.b16 %v1308
        %v2052 = vunpack.c.l.b16 %v1309
        %v2053 = vunpack.c.h.b16 %v1309
        %v2054 = vunpack.c.l.b16 %v1310
        %v2055 = vunpack.c.h.b16 %v1310
        %v2056 = vunpack.c.l.b16 %v1311
        %v2057 = vunpack.c.h.b16 %v1311
        %v2058 = vunpack.c.l.b16 %v1312
        %v2059 = vunpack.c.h.b16 %v1312
        %v2060 = vunpack.c.l.b16 %v1313
        %v2061 = vunpack.c.h.b16 %v1313
        %v2062 = vunpack.c.l.b16 %v1314
        %v2063 = vunpack.c.h.b16 %v1314
        %v2064 = vunpack.c.l.b16 %v1315
        %v2065 = vunpack.c.h.b16 %v1315
        %v2066 = vunpack.c.l.b16 %v1316
        %v2067 = vunpack.c.h.b16 %v1316
        %v2068 = vunpack.c.l.b16 %v1317
        %v2069 = vunpack.c.h.b16 %v1317
        %v2070 = vunpack.c.l.b16 %v1318
        %v2071 = vunpack.c.h.b16 %v1318
        %v2072 = vunpack.c.l.b16 %v1319
        %v2073 = vunpack.c.h.b16 %v1319
        %v2074 = vunpack.c.l.b16 %v1320
        %v2075 = vunpack.c.h.b16 %v1320
        %v2076 = vunpack.c.l.b16 %v1321
        %v2077 = vunpack.c.h.b16 %v1321
        %v2078 = vunpack.c.l.b16 %v1322
        %v2079 = vunpack.c.h.b16 %v1322
        %v2080 = vunpack.c.l.b16 %v1323
        %v2081 = vunpack.c.h.b16 %v1323
        %v2082 = vunpack.c.l.b16 %v1324
        %v2083 = vunpack.c.h.b16 %v1324
        %v2084 = vunpack.c.l.b16 %v1325
        %v2085 = vunpack.c.h.b16 %v1325
        %v2086 = vunpack.c.l.b16 %v1326
        %v2087 = vunpack.c.h.b16 %v1326
        %v2088 = vunpack.c.l.b16 %v1327
        %v2089 = vunpack.c.h.b16 %v1327
        %v2090 = vunpack.c.l.b16 %v1328
        %v2091 = vunpack.c.h.b16 %v1328
        %v2092 = vunpack.c.l.b16 %v1329
        %v2093 = vunpack.c.h.b16 %v1329
        %v2094 = vunpack.c.l.b16 %v1330
        %v2095 = vunpack.c.h.b16 %v1330
        %v2096 = vunpack.c.l.b16 %v1331
        %v2097 = vunpack.c.h.b16 %v1331
        %v2098 = vunpack.c.l.b16 %v1332
        %v2099 = vunpack.c.h.b16 %v1332
        %v2100 = vunpack.c.l.b16 %v1333
        %v2101 = vunpack.c.h.b16 %v1333
        %v2102 = vunpack.c.l.b16 %v1334
        %v2103 = vunpack.c.h.b16 %v1334
        %v2104 = vunpack.c.l.b16 %v1335
        %v2105 = vunpack.c.h.b16 %v1335
        %v2106 = vunpack.c.l.b16 %v1336
        %v2107 = vunpack.c.h.b16 %v1336
        %v2108 = vunpack.c.l.b16 %v1337
        %v2109 = vunpack.c.h.b16 %v1337
        %v2110 = vunpack.c.l.b16 %v1338
        %v2111 = vunpack.c.h.b16 %v1338
        %v2112 = vunpack.c.l.b16 %v1339
        %v2113 = vunpack.c.h.b16 %v1339
        %v2114 = vunpack.c.l.b16 %v1340
        %v2115 = vunpack.c.h.b16 %v1340
        %v2116 = vunpack.c.l.b16 %v1341
        %v2117 = vunpack.c.h.b16 %v1341
        %v2118 = vunpack.c.l.b16 %v1342
        %v2119 = vunpack.c.h.b16 %v1342
        %v2120 = vunpack.c.l.b16 %v1343
        %v2121 = vunpack.c.h.b16 %v1343
        %v2122 = vunpack.c.l.b16 %v1344
        %v2123 = vunpack.c.h.b16 %v1344
        %v2124 = vunpack.c.l.b16 %v1345
        %v2125 = vunpack.c.h.b16 %v1345
        %v2126 = vunpack.c.l.b16 %v1346
        %v2127 = vunpack.c.h.b16 %v1346
        %v2128 = vunpack.c.l.b16 %v1347
        %v2129 = vunpack.c.h.b16 %v1347
        %v2130 = vunpack.c.l.b16 %v1348
        %v2131 = vunpack.c.h.b16 %v1348
        %v2132 = vunpack.c.l.b16 %v1349
        %v2133 = vunpack.c.h.b16 %v1349
        %v2134 = vunpack.c.l.b16 %v1350
        %v2135 = vunpack.c.h.b16 %v1350
        %v2136 = vunpack.c.l.b16 %v1351
        %v2137 = vunpack.c.h.b16 %v1351
        %v2138 = vunpack.c.l.b16 %v1352
        %v2139 = vunpack.c.h.b16 %v1352
        %v2140 = vunpack.c.l.b16 %v1353
        %v2141 = vunpack.c.h.b16 %v1353
        %v2142 = vunpack.c.l.b16 %v1354
        %v2143 = vunpack.c.h.b16 %v1354
        %v2144 = vunpack.c.l.b16 %v1355
        %v2145 = vunpack.c.h.b16 %v1355
        %v2146 = vunpack.c.l.b16 %v1356
        %v2147 = vunpack.c.h.b16 %v1356
        %v2148 = vunpack.c.l.b16 %v1357
        %v2149 = vunpack.c.h.b16 %v1357
        %v2150 = vunpack.c.l.b16 %v1358
        %v2151 = vunpack.c.h.b16 %v1358
        %v2152 = vunpack.c.l.b16 %v1359
        %v2153 = vunpack.c.h.b16 %v1359
        %v2154 = vunpack.c.l.b16 %v1360
        %v2155 = vunpack.c.h.b16 %v1360
        %v2156 = vunpack.c.l.b16 %v1361
        %v2157 = vunpack.c.h.b16 %v1361
        %v2158 = vunpack.c.l.b16 %v1362
        %v2159 = vunpack.c.h.b16 %v1362
        %v2160 = vunpack.c.l.b16 %v1363
        %v2161 = vunpack.c.h.b16 %v1363
        %v2162 = vunpack.c.l.b16 %v1364
        %v2163 = vunpack.c.h.b16 %v1364
        %v2164 = vunpack.c.l.b16 %v1365
        %v2165 = vunpack.c.h.b16 %v1365
        %v2166 = vunpack.c.l.b16 %v1366
        %v2167 = vunpack.c.h.b16 %v1366
        %v2168 = vunpack.c.l.b16 %v1367
        %v2169 = vunpack.c.h.b16 %v1367
        %v2170 = vunpack.c.l.b16 %v1368
        %v2171 = vunpack.c.h.b16 %v1368
        %v2172 = vunpack.c.l.b16 %v1369
        %v2173 = vunpack.c.h.b16 %v1369
        %v2174 = vunpack.c.l.b16 %v1370
        %v2175 = vunpack.c.h.b16 %v1370
        %v2176 = vunpack.c.l.b16 %v1371
        %v2177 = vunpack.c.h.b16 %v1371
        %v2178 = vunpack.c.l.b16 %v1372
        %v2179 = vunpack.c.h.b16 %v1372
        %v2180 = vunpack.c.l.b16 %v1373
        %v2181 = vunpack.c.h.b16 %v1373
        %v2182 = vunpack.c.l.b16 %v1374
        %v2183 = vunpack.c.h.b16 %v1374
        %v2184 = vunpack.c.l.b16 %v1375
        %v2185 = vunpack.c.h.b16 %v1375
        %v2186 = vpack.c.b16 %v1682, %v1674
        %v2187 = vpack.c.b16 %v1683, %v1675
        %v2188 = vpack.c.b16 %v1684, %v1676
        %v2189 = vpack.c.b16 %v1685, %v1677
        %v2190 = vpack.c.b16 %v1686, %v1678
        %v2191 = vpack.c.b16 %v1687, %v1679
        %v2192 = vpack.c.b16 %v1688, %v1680
        %v2193 = vpack.c.b16 %v1689, %v1681
        %v2194 = vpack.c.b16 %v1698, %v1690
        %v2195 = vpack.c.b16 %v1699, %v1691
        %v2196 = vpack.c.b16 %v1700, %v1692
        %v2197 = vpack.c.b16 %v1701, %v1693
        %v2198 = vpack.c.b16 %v1702, %v1694
        %v2199 = vpack.c.b16 %v1703, %v1695
        %v2200 = vpack.c.b16 %v1704, %v1696
        %v2201 = vpack.c.b16 %v1705, %v1697
        %v2202 = vpack.c.b16 %v1714, %v1706
        %v2203 = vpack.c.b16 %v1715, %v1707
        %v2204 = vpack.c.b16 %v1716, %v1708
        %v2205 = vpack.c.b16 %v1717, %v1709
        %v2206 = vpack.c.b16 %v1718, %v1710
        %v2207 = vpack.c.b16 %v1719, %v1711
        %v2208 = vpack.c.b16 %v1720, %v1712
        %v2209 = vpack.c.b16 %v1721, %v1713
        %v2210 = vpack.c.b16 %v1730, %v1722
        %v2211 = vpack.c.b16 %v1731, %v1723
        %v2212 = vpack.c.b16 %v1732, %v1724
        %v2213 = vpack.c.b16 %v1733, %v1725
        %v2214 = vpack.c.b16 %v1734, %v1726
        %v2215 = vpack.c.b16 %v1735, %v1727
        %v2216 = vpack.c.b16 %v1736, %v1728
        %v2217 = vpack.c.b16 %v1737, %v1729
        %v2218 = vpack.c.b16 %v1746, %v1738
        %v2219 = vpack.c.b16 %v1747, %v1739
        %v2220 = vpack.c.b16 %v1748, %v1740
        %v2221 = vpack.c.b16 %v1749, %v1741
        %v2222 = vpack.c.b16 %v1750, %v1742
        %v2223 = vpack.c.b16 %v1751, %v1743
        %v2224 = vpack.c.b16 %v1752, %v1744
        %v2225 = vpack.c.b16 %v1753, %v1745
        %v2226 = vpack.c.b16 %v1762, %v1754
        %v2227 = vpack.c.b16 %v1763, %v1755
        %v2228 = vpack.c.b16 %v1764, %v1756
        %v2229 = vpack.c.b16 %v1765, %v1757
        %v2230 = vpack.c.b16 %v1766, %v1758
        %v2231 = vpack.c.b16 %v1767, %v1759
        %v2232 = vpack.c.b16 %v1768, %v1760
        %v2233 = vpack.c.b16 %v1769, %v1761
        %v2234 = vpack.c.b16 %v1778, %v1770
        %v2235 = vpack.c.b16 %v1779, %v1771
        %v2236 = vpack.c.b16 %v1780, %v1772
        %v2237 = vpack.c.b16 %v1781, %v1773
        %v2238 = vpack.c.b16 %v1782, %v1774
        %v2239 = vpack.c.b16 %v1783, %v1775
        %v2240 = vpack.c.b16 %v1784, %v1776
        %v2241 = vpack.c.b16 %v1785, %v1777
        %v2242 = vpack.c.b16 %v1794, %v1786
        %v2243 = vpack.c.b16 %v1795, %v1787
        %v2244 = vpack.c.b16 %v1796, %v1788
        %v2245 = vpack.c.b16 %v1797, %v1789
        %v2246 = vpack.c.b16 %v1798, %v1790
        %v2247 = vpack.c.b16 %v1799, %v1791
        %v2248 = vpack.c.b16 %v1800, %v1792
        %v2249 = vpack.c.b16 %v1801, %v1793
        %v2250 = vpack.c.b16 %v1810, %v1802
        %v2251 = vpack.c.b16 %v1811, %v1803
        %v2252 = vpack.c.b16 %v1812, %v1804
        %v2253 = vpack.c.b16 %v1813, %v1805
        %v2254 = vpack.c.b16 %v1814, %v1806
        %v2255 = vpack.c.b16 %v1815, %v1807
        %v2256 = vpack.c.b16 %v1816, %v1808
        %v2257 = vpack.c.b16 %v1817, %v1809
        %v2258 = vpack.c.b16 %v1826, %v1818
        %v2259 = vpack.c.b16 %v1827, %v1819
        %v2260 = vpack.c.b16 %v1828, %v1820
        %v2261 = vpack.c.b16 %v1829, %v1821
        %v2262 = vpack.c.b16 %v1830, %v1822
        %v2263 = vpack.c.b16 %v1831, %v1823
        %v2264 = vpack.c.b16 %v1832, %v1824
        %v2265 = vpack.c.b16 %v1833, %v1825
        %v2266 = vpack.c.b16 %v1842, %v1834
        %v2267 = vpack.c.b16 %v1843, %v1835
        %v2268 = vpack.c.b16 %v1844, %v1836
        %v2269 = vpack.c.b16 %v1845, %v1837
        %v2270 = vpack.c.b16 %v1846, %v1838
        %v2271 = vpack.c.b16 %v1847, %v1839
        %v2272 = vpack.c.b16 %v1848, %v1840
        %v2273 = vpack.c.b16 %v1849, %v1841
        %v2274 = vpack.c.b16 %v1858, %v1850
        %v2275 = vpack.c.b16 %v1859, %v1851
        %v2276 = vpack.c.b16 %v1860, %v1852
        %v2277 = vpack.c.b16 %v1861, %v1853
        %v2278 = vpack.c.b16 %v1862, %v1854
        %v2279 = vpack.c.b16 %v1863, %v1855
        %v2280 = vpack.c.b16 %v1864, %v1856
        %v2281 = vpack.c.b16 %v1865, %v1857
        %v2282 = vpack.c.b16 %v1874, %v1866
        %v2283 = vpack.c.b16 %v1875, %v1867
        %v2284 = vpack.c.b16 %v1876, %v1868
        %v2285 = vpack.c.b16 %v1877, %v1869
        %v2286 = vpack.c.b16 %v1878, %v1870
        %v2287 = vpack.c.b16 %v1879, %v1871
        %v2288 = vpack.c.b16 %v1880, %v1872
        %v2289 = vpack.c.b16 %v1881, %v1873
        %v2290 = vpack.c.b16 %v1890, %v1882
        %v2291 = vpack.c.b16 %v1891, %v1883
        %v2292 = vpack.c.b16 %v1892, %v1884
        %v2293 = vpack.c.b16 %v1893, %v1885
        %v2294 = vpack.c.b16 %v1894, %v1886
        %v2295 = vpack.c.b16 %v1895, %v1887
        %v2296 = vpack.c.b16 %v1896, %v1888
        %v2297 = vpack.c.b16 %v1897, %v1889
        %v2298 = vpack.c.b16 %v1906, %v1898
        %v2299 = vpack.c.b16 %v1907, %v1899
        %v2300 = vpack.c.b16 %v1908, %v1900
        %v2301 = vpack.c.b16 %v1909, %v1901
        %v2302 = vpack.c.b16 %v1910, %v1902
        %v2303 = vpack.c.b16 %v1911, %v1903
        %v2304 = vpack.c.b16 %v1912, %v1904
        %v2305 = vpack.c.b16 %v1913, %v1905
        %v2306 = vpack.c.b16 %v1922, %v1914
        %v2307 = vpack.c.b16 %v1923, %v1915
        %v2308 = vpack.c.b16 %v1924, %v1916
        %v2309 = vpack.c.b16 %v1925, %v1917
        %v2310 = vpack.c.b16 %v1926, %v1918
        %v2311 = vpack.c.b16 %v1927, %v1919
        %v2312 = vpack.c.b16 %v1928, %v1920
        %v2313 = vpack.c.b16 %v1929, %v1921
        %v2314 = vpack.c.b16 %v1938, %v1930
        %v2315 = vpack.c.b16 %v1939, %v1931
        %v2316 = vpack.c.b16 %v1940, %v1932
        %v2317 = vpack.c.b16 %v1941, %v1933
        %v2318 = vpack.c.b16 %v1942, %v1934
        %v2319 = vpack.c.b16 %v1943, %v1935
        %v2320 = vpack.c.b16 %v1944, %v1936
        %v2321 = vpack.c.b16 %v1945, %v1937
        %v2322 = vpack.c.b16 %v1954, %v1946
        %v2323 = vpack.c.b16 %v1955, %v1947
        %v2324 = vpack.c.b16 %v1956, %v1948
        %v2325 = vpack.c.b16 %v1957, %v1949
        %v2326 = vpack.c.b16 %v1958, %v1950
        %v2327 = vpack.c.b16 %v1959, %v1951
        %v2328 = vpack.c.b16 %v1960, %v1952
        %v2329 = vpack.c.b16 %v1961, %v1953
        %v2330 = vpack.c.b16 %v1970, %v1962
        %v2331 = vpack.c.b16 %v1971, %v1963
        %v2332 = vpack.c.b16 %v1972, %v1964
        %v2333 = vpack.c.b16 %v1973, %v1965
        %v2334 = vpack.c.b16 %v1974, %v1966
        %v2335 = vpack.c.b16 %v1975, %v1967
        %v2336 = vpack.c.b16 %v1976, %v1968
        %v2337 = vpack.c.b16 %v1977, %v1969
        %v2338 = vpack.c.b16 %v1986, %v1978
        %v2339 = vpack.c.b16 %v1987, %v1979
        %v2340 = vpack.c.b16 %v1988, %v1980
        %v2341 = vpack.c.b16 %v1989, %v1981
        %v2342 = vpack.c.b16 %v1990, %v1982
        %v2343 = vpack.c.b16 %v1991, %v1983
        %v2344 = vpack.c.b16 %v1992, %v1984
        %v2345 = vpack.c.b16 %v1993, %v1985
        %v2346 = vpack.c.b16 %v2002, %v1994
        %v2347 = vpack.c.b16 %v2003, %v1995
        %v2348 = vpack.c.b16 %v2004, %v1996
        %v2349 = vpack.c.b16 %v2005, %v1997
        %v2350 = vpack.c.b16 %v2006, %v1998
        %v2351 = vpack.c.b16 %v2007, %v1999
        %v2352 = vpack.c.b16 %v2008, %v2000
        %v2353 = vpack.c.b16 %v2009, %v2001
        %v2354 = vpack.c.b16 %v2018, %v2010
        %v2355 = vpack.c.b16 %v2019, %v2011
        %v2356 = vpack.c.b16 %v2020, %v2012
        %v2357 = vpack.c.b16 %v2021, %v2013
        %v2358 = vpack.c.b16 %v2022, %v2014
        %v2359 = vpack.c.b16 %v2023, %v2015
        %v2360 = vpack.c.b16 %v2024, %v2016
        %v2361 = vpack.c.b16 %v2025, %v2017
        %v2362 = vpack.c.b16 %v2034, %v2026
        %v2363 = vpack.c.b16 %v2035, %v2027
        %v2364 = vpack.c.b16 %v2036, %v2028
        %v2365 = vpack.c.b16 %v2037, %v2029
        %v2366 = vpack.c.b16 %v2038, %v2030
        %v2367 = vpack.c.b16 %v2039, %v2031
        %v2368 = vpack.c.b16 %v2040, %v2032
        %v2369 = vpack.c.b16 %v2041, %v2033
        %v2370 = vpack.c.b16 %v2050, %v2042
        %v2371 = vpack.c.b16 %v2051, %v2043
        %v2372 = vpack.c.b16 %v2052, %v2044
        %v2373 = vpack.c.b16 %v2053, %v2045
        %v2374 = vpack.c.b16 %v2054, %v2046
        %v2375 = vpack.c.b16 %v2055, %v2047
        %v2376 = vpack.c.b16 %v2056, %v2048
        %v2377 = vpack.c.b16 %v2057, %v2049
        %v2378 = vpack.c.b16 %v2066, %v2058
        %v2379 = vpack.c.b16 %v2067, %v2059
        %v2380 = vpack.c.b16 %v2068, %v2060
        %v2381 = vpack.c.b16 %v2069, %v2061
        %v2382 = vpack.c.b16 %v2070, %v2062
        %v2383 = vpack.c.b16 %v2071, %v2063
        %v2384 = vpack.c.b16 %v2072, %v2064
        %v2385 = vpack.c.b16 %v2073, %v2065
        %v2386 = vpack.c.b16 %v2082, %v2074
        %v2387 = vpack.c.b16 %v2083, %v2075
        %v2388 = vpack.c.b16 %v2084, %v2076
        %v2389 = vpack.c.b16 %v2085, %v2077
        %v2390 = vpack.c.b16 %v2086, %v2078
        %v2391 = vpack.c.b16 %v2087, %v2079
        %v2392 = vpack.c.b16 %v2088, %v2080
        %v2393 = vpack.c.b16 %v2089, %v2081
        %v2394 = vpack.c.b16 %v2098, %v2090
        %v2395 = vpack.c.b16 %v2099, %v2091
        %v2396 = vpack.c.b16 %v2100, %v2092
        %v2397 = vpack.c.b16 %v2101, %v2093
        %v2398 = vpack.c.b16 %v2102, %v2094
        %v2399 = vpack.c.b16 %v2103, %v2095
        %v2400 = vpack.c.b16 %v2104, %v2096
        %v2401 = vpack.c.b16 %v2105, %v2097
        %v2402 = vpack.c.b16 %v2114, %v2106
        %v2403 = vpack.c.b16 %v2115, %v2107
        %v2404 = vpack.c.b16 %v2116, %v2108
        %v2405 = vpack.c.b16 %v2117, %v2109
        %v2406 = vpack.c.b16 %v2118, %v2110
        %v2407 = vpack.c.b16 %v2119, %v2111
        %v2408 = vpack.c.b16 %v2120, %v2112
        %v2409 = vpack.c.b16 %v2121, %v2113
        %v2410 = vpack.c.b16 %v2130, %v2122
        %v2411 = vpack.c.b16 %v2131, %v2123
        %v2412 = vpack.c.b16 %v2132, %v2124
        %v2413 = vpack.c.b16 %v2133, %v2125
        %v2414 = vpack.c.b16 %v2134, %v2126
        %v2415 = vpack.c.b16 %v2135, %v2127
        %v2416 = vpack.c.b16 %v2136, %v2128
        %v2417 = vpack.c.b16 %v2137, %v2129
        %v2418 = vpack.c.b16 %v2146, %v2138
        %v2419 = vpack.c.b16 %v2147, %v2139
        %v2420 = vpack.c.b16 %v2148, %v2140
        %v2421 = vpack.c.b16 %v2149, %v2141
        %v2422 = vpack.c.b16 %v2150, %v2142
        %v2423 = vpack.c.b16 %v2151, %v2143
        %v2424 = vpack.c.b16 %v2152, %v2144
        %v2425 = vpack.c.b16 %v2153, %v2145
        %v2426 = vpack.c.b16 %v2162, %v2154
        %v2427 = vpack.c.b16 %v2163, %v2155
        %v2428 = vpack.c.b16 %v2164, %v2156
        %v2429 = vpack.c.b16 %v2165, %v2157
        %v2430 = vpack.c.b16 %v2166, %v2158
        %v2431 = vpack.c.b16 %v2167, %v2159
        %v2432 = vpack.c.b16 %v2168, %v2160
        %v2433 = vpack.c.b16 %v2169, %v2161
        %v2434 = vpack.c.b16 %v2178, %v2170
        %v2435 = vpack.c.b16 %v2179, %v2171
        %v2436 = vpack.c.b16 %v2180, %v2172
        %v2437 = vpack.c.b16 %v2181, %v2173
        %v2438 = vpack.c.b16 %v2182, %v2174
        %v2439 = vpack.c.b16 %v2183, %v2175
        %v2440 = vpack.c.b16 %v2184, %v2176
        %v2441 = vpack.c.b16 %v2185, %v2177
        %2698 = vmatprep.subr.bf16.mxu0 %v2243
        %2699 = vmatpush1.bf16.msra.mxu0 %v2242
        %2700 = vmatprep.subr.bf16.mxu0 %v2235
        %2701 = vmatpush1.bf16.msra.mxu0 %v2234
        %2702 = vmatprep.subr.bf16.mxu0 %v2227
        %2703 = vmatpush1.bf16.msra.mxu0 %v2226
        %2704 = vmatprep.subr.bf16.mxu0 %v2219
        %2705 = vmatpush1.bf16.msra.mxu0 %v2218
        %2706 = vmatprep.subr.bf16.mxu0 %v2211
        %2707 = vmatpush1.bf16.msra.mxu0 %v2210
        %2708 = vmatprep.subr.bf16.mxu0 %v2203
        %2709 = vmatpush1.bf16.msra.mxu0 %v2202
        %2710 = vmatprep.subr.bf16.mxu0 %v2195
        %2711 = vmatpush1.bf16.msra.mxu0 %v2194
        %2712 = vmatprep.subr.bf16.mxu0 %v2187
        %2713 = vmatpush1.bf16.msra.mxu0 %v2186
        %2714 = vmatprep.subr.bf16.mxu0 %v2307
        %2715 = vmatpush2.bf16.msra.mxu0 %v2306
        %2716 = vmatprep.subr.bf16.mxu0 %v2299
        %2717 = vmatpush2.bf16.msra.mxu0 %v2298
        %2718 = vmatprep.subr.bf16.mxu0 %v2291
        %2719 = vmatpush2.bf16.msra.mxu0 %v2290
        %2720 = vmatprep.subr.bf16.mxu0 %v2283
        %2721 = vmatpush2.bf16.msra.mxu0 %v2282
        %2722 = vmatprep.subr.bf16.mxu0 %v2275
        %2723 = vmatpush2.bf16.msra.mxu0 %v2274
        %2724 = vmatprep.subr.bf16.mxu0 %v2267
        %2725 = vmatpush2.bf16.msra.mxu0 %v2266
        %2726 = vmatprep.subr.bf16.mxu0 %v2259
        %2727 = vmatpush2.bf16.msra.mxu0 %v2258
        %2728 = vmatprep.subr.bf16.mxu0 %v2251
        %2729 = vmatpush2.bf16.msra.mxu0 %v2250
        %2730 = vmatprep.mubr.bf16.mxu0 %v1117
        %2731 = vmatmul.mubr.bf16.gmra.mxu0 %v1116
        %v2732 = vpop.f32.mrf.mxu0
        %v2733 = vadd.f32 %v1381, %v2732
        %v2734 = vpop.f32.mrf.mxu0
        %v2735 = vadd.f32 %v1385, %v2734
        %v2736 = vpop.f32.mrf.mxu0
        %v2737 = vadd.f32 %v1381, %v2736
        %v2738 = vpop.f32.mrf.mxu0
        %v2739 = vadd.f32 %v1385, %v2738
        %2740 = vdwg.mxu0
        %2741 = vmatprep.subr.bf16.mxu0 %v2371
        %2742 = vmatpush1.bf16.msra.mxu0 %v2370
        %2743 = vmatprep.subr.bf16.mxu0 %v2363
        %2744 = vmatpush1.bf16.msra.mxu0 %v2362
        %2745 = vmatprep.subr.bf16.mxu0 %v2355
        %2746 = vmatpush1.bf16.msra.mxu0 %v2354
        %2747 = vmatprep.subr.bf16.mxu0 %v2347
        %2748 = vmatpush1.bf16.msra.mxu0 %v2346
        %2749 = vmatprep.subr.bf16.mxu0 %v2339
        %2750 = vmatpush1.bf16.msra.mxu0 %v2338
        %2751 = vmatprep.subr.bf16.mxu0 %v2331
        %2752 = vmatpush1.bf16.msra.mxu0 %v2330
        %2753 = vmatprep.subr.bf16.mxu0 %v2323
        %2754 = vmatpush1.bf16.msra.mxu0 %v2322
        %2755 = vmatprep.subr.bf16.mxu0 %v2315
        %2756 = vmatpush1.bf16.msra.mxu0 %v2314
        %2757 = vmatprep.subr.bf16.mxu0 %v2435
        %2758 = vmatpush2.bf16.msra.mxu0 %v2434
        %2759 = vmatprep.subr.bf16.mxu0 %v2427
        %2760 = vmatpush2.bf16.msra.mxu0 %v2426
        %2761 = vmatprep.subr.bf16.mxu0 %v2419
        %2762 = vmatpush2.bf16.msra.mxu0 %v2418
        %2763 = vmatprep.subr.bf16.mxu0 %v2411
        %2764 = vmatpush2.bf16.msra.mxu0 %v2410
        %2765 = vmatprep.subr.bf16.mxu0 %v2403
        %2766 = vmatpush2.bf16.msra.mxu0 %v2402
        %2767 = vmatprep.subr.bf16.mxu0 %v2395
        %2768 = vmatpush2.bf16.msra.mxu0 %v2394
        %2769 = vmatprep.subr.bf16.mxu0 %v2387
        %2770 = vmatpush2.bf16.msra.mxu0 %v2386
        %2771 = vmatprep.subr.bf16.mxu0 %v2379
        %2772 = vmatpush2.bf16.msra.mxu0 %v2378
        %2773 = vmatprep.mubr.bf16.mxu0 %v1119
        %2774 = vmatmul.mubr.bf16.gmra.mxu0 %v1118
        %v2775 = vpop.f32.mrf.mxu0
        %v2776 = vadd.f32 %v2733, %v2775
        %v2777 = vpop.f32.mrf.mxu0
        %v2778 = vadd.f32 %v2735, %v2777
        %v2779 = vpop.f32.mrf.mxu0
        %v2780 = vadd.f32 %v2737, %v2779
        %v2781 = vpop.f32.mrf.mxu0
        %v2782 = vadd.f32 %v2739, %v2781
        %2783 = vdwg.mxu0
        %2784 = vmatprep.subr.bf16.mxu0 %v2245
        %2785 = vmatpush1.bf16.msra.mxu0 %v2244
        %2786 = vmatprep.subr.bf16.mxu0 %v2237
        %2787 = vmatpush1.bf16.msra.mxu0 %v2236
        %2788 = vmatprep.subr.bf16.mxu0 %v2229
        %2789 = vmatpush1.bf16.msra.mxu0 %v2228
        %2790 = vmatprep.subr.bf16.mxu0 %v2221
        %2791 = vmatpush1.bf16.msra.mxu0 %v2220
        %2792 = vmatprep.subr.bf16.mxu0 %v2213
        %2793 = vmatpush1.bf16.msra.mxu0 %v2212
        %2794 = vmatprep.subr.bf16.mxu0 %v2205
        %2795 = vmatpush1.bf16.msra.mxu0 %v2204
        %2796 = vmatprep.subr.bf16.mxu0 %v2197
        %2797 = vmatpush1.bf16.msra.mxu0 %v2196
        %2798 = vmatprep.subr.bf16.mxu0 %v2189
        %2799 = vmatpush1.bf16.msra.mxu0 %v2188
        %2800 = vmatprep.subr.bf16.mxu0 %v2309
        %2801 = vmatpush2.bf16.msra.mxu0 %v2308
        %2802 = vmatprep.subr.bf16.mxu0 %v2301
        %2803 = vmatpush2.bf16.msra.mxu0 %v2300
        %2804 = vmatprep.subr.bf16.mxu0 %v2293
        %2805 = vmatpush2.bf16.msra.mxu0 %v2292
        %2806 = vmatprep.subr.bf16.mxu0 %v2285
        %2807 = vmatpush2.bf16.msra.mxu0 %v2284
        %2808 = vmatprep.subr.bf16.mxu0 %v2277
        %2809 = vmatpush2.bf16.msra.mxu0 %v2276
        %2810 = vmatprep.subr.bf16.mxu0 %v2269
        %2811 = vmatpush2.bf16.msra.mxu0 %v2268
        %2812 = vmatprep.subr.bf16.mxu0 %v2261
        %2813 = vmatpush2.bf16.msra.mxu0 %v2260
        %2814 = vmatprep.subr.bf16.mxu0 %v2253
        %2815 = vmatpush2.bf16.msra.mxu0 %v2252
        %2816 = vmatprep.mubr.bf16.mxu0 %v1117
        %2817 = vmatmul.mubr.bf16.gmra.mxu0 %v1116
        %v2818 = vpop.f32.mrf.mxu0
        %v2819 = vadd.f32 %v1389, %v2818
        %v2820 = vpop.f32.mrf.mxu0
        %v2821 = vadd.f32 %v1393, %v2820
        %v2822 = vpop.f32.mrf.mxu0
        %v2823 = vadd.f32 %v1389, %v2822
        %v2824 = vpop.f32.mrf.mxu0
        %v2825 = vadd.f32 %v1393, %v2824
        %2826 = vdwg.mxu0
        %2827 = vmatprep.subr.bf16.mxu0 %v2373
        %2828 = vmatpush1.bf16.msra.mxu0 %v2372
        %2829 = vmatprep.subr.bf16.mxu0 %v2365
        %2830 = vmatpush1.bf16.msra.mxu0 %v2364
        %2831 = vmatprep.subr.bf16.mxu0 %v2357
        %2832 = vmatpush1.bf16.msra.mxu0 %v2356
        %2833 = vmatprep.subr.bf16.mxu0 %v2349
        %2834 = vmatpush1.bf16.msra.mxu0 %v2348
        %2835 = vmatprep.subr.bf16.mxu0 %v2341
        %2836 = vmatpush1.bf16.msra.mxu0 %v2340
        %2837 = vmatprep.subr.bf16.mxu0 %v2333
        %2838 = vmatpush1.bf16.msra.mxu0 %v2332
        %2839 = vmatprep.subr.bf16.mxu0 %v2325
        %2840 = vmatpush1.bf16.msra.mxu0 %v2324
        %2841 = vmatprep.subr.bf16.mxu0 %v2317
        %2842 = vmatpush1.bf16.msra.mxu0 %v2316
        %2843 = vmatprep.subr.bf16.mxu0 %v2437
        %2844 = vmatpush2.bf16.msra.mxu0 %v2436
        %2845 = vmatprep.subr.bf16.mxu0 %v2429
        %2846 = vmatpush2.bf16.msra.mxu0 %v2428
        %2847 = vmatprep.subr.bf16.mxu0 %v2421
        %2848 = vmatpush2.bf16.msra.mxu0 %v2420
        %2849 = vmatprep.subr.bf16.mxu0 %v2413
        %2850 = vmatpush2.bf16.msra.mxu0 %v2412
        %2851 = vmatprep.subr.bf16.mxu0 %v2405
        %2852 = vmatpush2.bf16.msra.mxu0 %v2404
        %2853 = vmatprep.subr.bf16.mxu0 %v2397
        %2854 = vmatpush2.bf16.msra.mxu0 %v2396
        %2855 = vmatprep.subr.bf16.mxu0 %v2389
        %2856 = vmatpush2.bf16.msra.mxu0 %v2388
        %2857 = vmatprep.subr.bf16.mxu0 %v2381
        %2858 = vmatpush2.bf16.msra.mxu0 %v2380
        %2859 = vmatprep.mubr.bf16.mxu0 %v1119
        %2860 = vmatmul.mubr.bf16.gmra.mxu0 %v1118
        %v2861 = vpop.f32.mrf.mxu0
        %v2862 = vadd.f32 %v2819, %v2861
        %v2863 = vpop.f32.mrf.mxu0
        %v2864 = vadd.f32 %v2821, %v2863
        %v2865 = vpop.f32.mrf.mxu0
        %v2866 = vadd.f32 %v2823, %v2865
        %v2867 = vpop.f32.mrf.mxu0
        %v2868 = vadd.f32 %v2825, %v2867
        %2869 = vdwg.mxu0
        %2870 = vmatprep.subr.bf16.mxu0 %v2247
        %2871 = vmatpush1.bf16.msra.mxu0 %v2246
        %2872 = vmatprep.subr.bf16.mxu0 %v2239
        %2873 = vmatpush1.bf16.msra.mxu0 %v2238
        %2874 = vmatprep.subr.bf16.mxu0 %v2231
        %2875 = vmatpush1.bf16.msra.mxu0 %v2230
        %2876 = vmatprep.subr.bf16.mxu0 %v2223
        %2877 = vmatpush1.bf16.msra.mxu0 %v2222
        %2878 = vmatprep.subr.bf16.mxu0 %v2215
        %2879 = vmatpush1.bf16.msra.mxu0 %v2214
        %2880 = vmatprep.subr.bf16.mxu0 %v2207
        %2881 = vmatpush1.bf16.msra.mxu0 %v2206
        %2882 = vmatprep.subr.bf16.mxu0 %v2199
        %2883 = vmatpush1.bf16.msra.mxu0 %v2198
        %2884 = vmatprep.subr.bf16.mxu0 %v2191
        %2885 = vmatpush1.bf16.msra.mxu0 %v2190
        %2886 = vmatprep.subr.bf16.mxu0 %v2311
        %2887 = vmatpush2.bf16.msra.mxu0 %v2310
        %2888 = vmatprep.subr.bf16.mxu0 %v2303
        %2889 = vmatpush2.bf16.msra.mxu0 %v2302
        %2890 = vmatprep.subr.bf16.mxu0 %v2295
        %2891 = vmatpush2.bf16.msra.mxu0 %v2294
        %2892 = vmatprep.subr.bf16.mxu0 %v2287
        %2893 = vmatpush2.bf16.msra.mxu0 %v2286
        %2894 = vmatprep.subr.bf16.mxu0 %v2279
        %2895 = vmatpush2.bf16.msra.mxu0 %v2278
        %2896 = vmatprep.subr.bf16.mxu0 %v2271
        %2897 = vmatpush2.bf16.msra.mxu0 %v2270
        %2898 = vmatprep.subr.bf16.mxu0 %v2263
        %2899 = vmatpush2.bf16.msra.mxu0 %v2262
        %2900 = vmatprep.subr.bf16.mxu0 %v2255
        %2901 = vmatpush2.bf16.msra.mxu0 %v2254
        %2902 = vmatprep.mubr.bf16.mxu0 %v1117
        %2903 = vmatmul.mubr.bf16.gmra.mxu0 %v1116
        %v2904 = vpop.f32.mrf.mxu0
        %v2905 = vadd.f32 %v1397, %v2904
        %v2906 = vpop.f32.mrf.mxu0
        %v2907 = vadd.f32 %v1401, %v2906
        %v2908 = vpop.f32.mrf.mxu0
        %v2909 = vadd.f32 %v1397, %v2908
        %v2910 = vpop.f32.mrf.mxu0
        %v2911 = vadd.f32 %v1401, %v2910
        %2912 = vdwg.mxu0
        %2913 = vmatprep.subr.bf16.mxu0 %v2375
        %2914 = vmatpush1.bf16.msra.mxu0 %v2374
        %2915 = vmatprep.subr.bf16.mxu0 %v2367
        %2916 = vmatpush1.bf16.msra.mxu0 %v2366
        %2917 = vmatprep.subr.bf16.mxu0 %v2359
        %2918 = vmatpush1.bf16.msra.mxu0 %v2358
        %2919 = vmatprep.subr.bf16.mxu0 %v2351
        %2920 = vmatpush1.bf16.msra.mxu0 %v2350
        %2921 = vmatprep.subr.bf16.mxu0 %v2343
        %2922 = vmatpush1.bf16.msra.mxu0 %v2342
        %2923 = vmatprep.subr.bf16.mxu0 %v2335
        %2924 = vmatpush1.bf16.msra.mxu0 %v2334
        %2925 = vmatprep.subr.bf16.mxu0 %v2327
        %2926 = vmatpush1.bf16.msra.mxu0 %v2326
        %2927 = vmatprep.subr.bf16.mxu0 %v2319
        %2928 = vmatpush1.bf16.msra.mxu0 %v2318
        %2929 = vmatprep.subr.bf16.mxu0 %v2439
        %2930 = vmatpush2.bf16.msra.mxu0 %v2438
        %2931 = vmatprep.subr.bf16.mxu0 %v2431
        %2932 = vmatpush2.bf16.msra.mxu0 %v2430
        %2933 = vmatprep.subr.bf16.mxu0 %v2423
        %2934 = vmatpush2.bf16.msra.mxu0 %v2422
        %2935 = vmatprep.subr.bf16.mxu0 %v2415
        %2936 = vmatpush2.bf16.msra.mxu0 %v2414
        %2937 = vmatprep.subr.bf16.mxu0 %v2407
        %2938 = vmatpush2.bf16.msra.mxu0 %v2406
        %2939 = vmatprep.subr.bf16.mxu0 %v2399
        %2940 = vmatpush2.bf16.msra.mxu0 %v2398
        %2941 = vmatprep.subr.bf16.mxu0 %v2391
        %2942 = vmatpush2.bf16.msra.mxu0 %v2390
        %2943 = vmatprep.subr.bf16.mxu0 %v2383
        %2944 = vmatpush2.bf16.msra.mxu0 %v2382
        %2945 = vmatprep.mubr.bf16.mxu0 %v1119
        %2946 = vmatmul.mubr.bf16.gmra.mxu0 %v1118
        %v2947 = vpop.f32.mrf.mxu0
        %v2948 = vadd.f32 %v2905, %v2947
        %v2949 = vpop.f32.mrf.mxu0
        %v2950 = vadd.f32 %v2907, %v2949
        %v2951 = vpop.f32.mrf.mxu0
        %v2952 = vadd.f32 %v2909, %v2951
        %v2953 = vpop.f32.mrf.mxu0
        %v2954 = vadd.f32 %v2911, %v2953
        %2955 = vdwg.mxu0
        %2956 = vmatprep.subr.bf16.mxu0 %v2249
        %2957 = vmatpush1.bf16.msra.mxu0 %v2248
        %2958 = vmatprep.subr.bf16.mxu0 %v2241
        %2959 = vmatpush1.bf16.msra.mxu0 %v2240
        %2960 = vmatprep.subr.bf16.mxu0 %v2233
        %2961 = vmatpush1.bf16.msra.mxu0 %v2232
        %2962 = vmatprep.subr.bf16.mxu0 %v2225
        %2963 = vmatpush1.bf16.msra.mxu0 %v2224
        %2964 = vmatprep.subr.bf16.mxu0 %v2217
        %2965 = vmatpush1.bf16.msra.mxu0 %v2216
        %2966 = vmatprep.subr.bf16.mxu0 %v2209
        %2967 = vmatpush1.bf16.msra.mxu0 %v2208
        %2968 = vmatprep.subr.bf16.mxu0 %v2201
        %2969 = vmatpush1.bf16.msra.mxu0 %v2200
        %2970 = vmatprep.subr.bf16.mxu0 %v2193
        %2971 = vmatpush1.bf16.msra.mxu0 %v2192
        %2972 = vmatprep.subr.bf16.mxu0 %v2313
        %2973 = vmatpush2.bf16.msra.mxu0 %v2312
        %2974 = vmatprep.subr.bf16.mxu0 %v2305
        %2975 = vmatpush2.bf16.msra.mxu0 %v2304
        %2976 = vmatprep.subr.bf16.mxu0 %v2297
        %2977 = vmatpush2.bf16.msra.mxu0 %v2296
        %2978 = vmatprep.subr.bf16.mxu0 %v2289
        %2979 = vmatpush2.bf16.msra.mxu0 %v2288
        %2980 = vmatprep.subr.bf16.mxu0 %v2281
        %2981 = vmatpush2.bf16.msra.mxu0 %v2280
        %2982 = vmatprep.subr.bf16.mxu0 %v2273
        %2983 = vmatpush2.bf16.msra.mxu0 %v2272
        %2984 = vmatprep.subr.bf16.mxu0 %v2265
        %2985 = vmatpush2.bf16.msra.mxu0 %v2264
        %2986 = vmatprep.subr.bf16.mxu0 %v2257
        %2987 = vmatpush2.bf16.msra.mxu0 %v2256
        %2988 = vmatprep.mubr.bf16.mxu0 %v1117
        %2989 = vmatmul.mubr.bf16.gmra.mxu0 %v1116
        %v2990 = vpop.f32.mrf.mxu0
        %v2991 = vadd.f32 %v1405, %v2990
        %v2992 = vpop.f32.mrf.mxu0
        %v2993 = vadd.f32 %v1409, %v2992
        %v2994 = vpop.f32.mrf.mxu0
        %v2995 = vadd.f32 %v1405, %v2994
        %v2996 = vpop.f32.mrf.mxu0
        %v2997 = vadd.f32 %v1409, %v2996
        %2998 = vdwg.mxu0
        %2999 = vmatprep.subr.bf16.mxu0 %v2377
        %3000 = vmatpush1.bf16.msra.mxu0 %v2376
        %3001 = vmatprep.subr.bf16.mxu0 %v2369
        %3002 = vmatpush1.bf16.msra.mxu0 %v2368
        %3003 = vmatprep.subr.bf16.mxu0 %v2361
        %3004 = vmatpush1.bf16.msra.mxu0 %v2360
        %3005 = vmatprep.subr.bf16.mxu0 %v2353
        %3006 = vmatpush1.bf16.msra.mxu0 %v2352
        %3007 = vmatprep.subr.bf16.mxu0 %v2345
        %3008 = vmatpush1.bf16.msra.mxu0 %v2344
        %3009 = vmatprep.subr.bf16.mxu0 %v2337
        %3010 = vmatpush1.bf16.msra.mxu0 %v2336
        %3011 = vmatprep.subr.bf16.mxu0 %v2329
        %3012 = vmatpush1.bf16.msra.mxu0 %v2328
        %3013 = vmatprep.subr.bf16.mxu0 %v2321
        %3014 = vmatpush1.bf16.msra.mxu0 %v2320
        %3015 = vmatprep.subr.bf16.mxu0 %v2441
        %3016 = vmatpush2.bf16.msra.mxu0 %v2440
        %3017 = vmatprep.subr.bf16.mxu0 %v2433
        %3018 = vmatpush2.bf16.msra.mxu0 %v2432
        %3019 = vmatprep.subr.bf16.mxu0 %v2425
        %3020 = vmatpush2.bf16.msra.mxu0 %v2424
        %3021 = vmatprep.subr.bf16.mxu0 %v2417
        %3022 = vmatpush2.bf16.msra.mxu0 %v2416
        %3023 = vmatprep.subr.bf16.mxu0 %v2409
        %3024 = vmatpush2.bf16.msra.mxu0 %v2408
        %3025 = vmatprep.subr.bf16.mxu0 %v2401
        %3026 = vmatpush2.bf16.msra.mxu0 %v2400
        %3027 = vmatprep.subr.bf16.mxu0 %v2393
        %3028 = vmatpush2.bf16.msra.mxu0 %v2392
        %3029 = vmatprep.subr.bf16.mxu0 %v2385
        %3030 = vmatpush2.bf16.msra.mxu0 %v2384
        %3031 = vmatprep.mubr.bf16.mxu0 %v1119
        %3032 = vmatmul.mubr.bf16.gmra.mxu0 %v1118
        %v3033 = vpop.f32.mrf.mxu0
        %v3034 = vadd.f32 %v2991, %v3033
        %v3035 = vpop.f32.mrf.mxu0
        %v3036 = vadd.f32 %v2993, %v3035
        %v3037 = vpop.f32.mrf.mxu0
        %v3038 = vadd.f32 %v2995, %v3037
        %v3039 = vpop.f32.mrf.mxu0
        %v3040 = vadd.f32 %v2997, %v3039
        %3041 = vdwg.mxu0
        %v3042 = vtanh.pop %v2776
        %v3043 = vtanh.pop %v2778
        %v3044 = vtanh.pop %v2862
        %v3045 = vtanh.pop %v2864
        %v3046 = vtanh.pop %v2948
        %v3047 = vtanh.pop %v2950
        %v3048 = vtanh.pop %v3034
        %v3049 = vtanh.pop %v3036
        %v3050 = vtanh.pop %v2780
        %v3051 = vtanh.pop %v2782
        %v3052 = vtanh.pop %v2866
        %v3053 = vtanh.pop %v2868
        %v3054 = vtanh.pop %v2952
        %v3055 = vtanh.pop %v2954
        %v3056 = vtanh.pop %v3038
        %v3057 = vtanh.pop %v3040
        %3058 = vst [vmem:[%s475] sm:$0xff] %v3042
        %3059 = vst [vmem:[%s475 + $0x8] sm:$0xff] %v3043
        %3060 = vst [vmem:[%s475 + $0x10] sm:$0xff] %v3044
        %3061 = vst [vmem:[%s475 + $0x18] sm:$0xff] %v3045
        %3062 = vst [vmem:[%s475 + $0x20] sm:$0xff] %v3046
        %3063 = vst [vmem:[%s475 + $0x28] sm:$0xff] %v3047
        %3064 = vst [vmem:[%s475 + $0x30] sm:$0xff] %v3048
        %3065 = vst [vmem:[%s475 + $0x38] sm:$0xff] %v3049
        %3066 = vst [vmem:[%s475 + $0x40] sm:$0xff] %v3050
        %3067 = vst [vmem:[%s475 + $0x48] sm:$0xff] %v3051
        %3068 = vst [vmem:[%s475 + $0x50] sm:$0xff] %v3052
        %3069 = vst [vmem:[%s475 + $0x58] sm:$0xff] %v3053
        %3070 = vst [vmem:[%s475 + $0x60] sm:$0xff] %v3054
        %3071 = vst [vmem:[%s475 + $0x68] sm:$0xff] %v3055
        %3072 = vst [vmem:[%s475 + $0x70] sm:$0xff] %v3056
        %3073 = vst [vmem:[%s475 + $0x78] sm:$0xff] %v3057
        %s3074 = sand.u32 %s234, 1
        %s3075 = sand.u32 %s234, 1
        %s3076 = smul.addr %s3075, 128
        %s3077 = scalar_lea.vmem [#allocation16], %s3076
        // Predicated region
        $region93: #{decoder_target.1} parent=55 // pred_check
          %p3078 = pneg %p244
        $region94: #{decoder_target.1} parent=55 // pred_check_branch
          %3080 = sbr.rel (%p3078) target = $region96
        $region95: #{decoder_target.1} parent=55 // pred_region
          %s3081 = smul.u32 8, %s27
          %s3082 = smul.addr %s3081, 8
          %s3083 = scalar_lea.vmem %s9, %s3082
          // Predicated region
          $region97: #{decoder_target.1} parent=95 // pred_check
            _
          $region98: #{decoder_target.1} parent=95 // pred_check_branch
            %3085 = sbr.rel (0) target = $region100
          $region99: #{decoder_target.1} parent=95 // pred_region
            // Predicated region
            $region101: #{decoder_target.1} parent=99 // pred_check
              _
            $region102: #{decoder_target.1} parent=99 // pred_check_branch
              %3087 = sbr.rel (0) target = $region104
            $region103: #{decoder_target.1} parent=99 // pred_region
              loop: start=0, step=1, limit=1
              $region105: #{decoder_target.1} parent=103 // loop_pre_header
                _
              $region106: #{decoder_target.1} parent=103 // loop_header
                %s3089 = sphi 0, %s3093
                %p3090 = scmp.ge.s32.totalorder %s3089, 1
                %s3094 = sphi %s3077, %s3077
                %s3095 = sphi %s3083, %s3083
              $region107: #{decoder_target.1} parent=103 // loop_header_branch
                %3092 = sbr.rel (%p3090) target = $region111
              $region108: #{decoder_target.1} parent=103 // loop_body
                %v3096 = vld [vmem:[%s3094] sm:$0xff]
                %3097 = vst [vmem:[%s3095] sm:$0xff] %v3096
                %v3098 = vld [vmem:[%s3094 + $0x8] sm:$0xff]
                %3099 = vst [vmem:[%s3095 + $0x8] sm:$0xff] %v3098
                %v3100 = vld [vmem:[%s3094 + $0x10] sm:$0xff]
                %3101 = vst [vmem:[%s3095 + $0x10] sm:$0xff] %v3100
                %v3102 = vld [vmem:[%s3094 + $0x18] sm:$0xff]
                %3103 = vst [vmem:[%s3095 + $0x18] sm:$0xff] %v3102
                %v3104 = vld [vmem:[%s3094 + $0x20] sm:$0xff]
                %3105 = vst [vmem:[%s3095 + $0x20] sm:$0xff] %v3104
                %v3106 = vld [vmem:[%s3094 + $0x28] sm:$0xff]
                %3107 = vst [vmem:[%s3095 + $0x28] sm:$0xff] %v3106
                %v3108 = vld [vmem:[%s3094 + $0x30] sm:$0xff]
                %3109 = vst [vmem:[%s3095 + $0x30] sm:$0xff] %v3108
                %v3110 = vld [vmem:[%s3094 + $0x38] sm:$0xff]
                %3111 = vst [vmem:[%s3095 + $0x38] sm:$0xff] %v3110
                %v3112 = vld [vmem:[%s3094 + $0x40] sm:$0xff]
                %3113 = vst [vmem:[%s3095 + $0x100] sm:$0xff] %v3112
                %v3114 = vld [vmem:[%s3094 + $0x48] sm:$0xff]
                %3115 = vst [vmem:[%s3095 + $0x108] sm:$0xff] %v3114
                %v3116 = vld [vmem:[%s3094 + $0x50] sm:$0xff]
                %3117 = vst [vmem:[%s3095 + $0x110] sm:$0xff] %v3116
                %v3118 = vld [vmem:[%s3094 + $0x58] sm:$0xff]
                %3119 = vst [vmem:[%s3095 + $0x118] sm:$0xff] %v3118
                %v3120 = vld [vmem:[%s3094 + $0x60] sm:$0xff]
                %3121 = vst [vmem:[%s3095 + $0x120] sm:$0xff] %v3120
                %v3122 = vld [vmem:[%s3094 + $0x68] sm:$0xff]
                %3123 = vst [vmem:[%s3095 + $0x128] sm:$0xff] %v3122
                %v3124 = vld [vmem:[%s3094 + $0x70] sm:$0xff]
                %3125 = vst [vmem:[%s3095 + $0x130] sm:$0xff] %v3124
                %v3126 = vld [vmem:[%s3094 + $0x78] sm:$0xff]
                %3127 = vst [vmem:[%s3095 + $0x138] sm:$0xff] %v3126
              $region109: #{decoder_target.1} parent=103 // loop_footer
                %s3093 = sadd.s32 1, %s3089
              $region110: #{decoder_target.1} parent=103 // loop_footer_branch
                %3088 = sbr.rel target = $region106
              $region111: #{decoder_target.1} parent=103 // loop_exit
                _
            $region104: #{decoder_target.1} parent=99 // pred_fallthru
              _
            // Predicated region
            $region112: #{decoder_target.1} parent=99 // pred_check
              _
            $region113: #{decoder_target.1} parent=99 // pred_check_branch
              %3129 = sbr.rel target = $region115
            $region114: #{decoder_target.1} parent=99 // pred_region
              _
            $region115: #{decoder_target.1} parent=99 // pred_fallthru
              _
          $region100: #{decoder_target.1} parent=95 // pred_fallthru
            _
          %3130 = vnop
        $region96: #{decoder_target.1} parent=55 // pred_fallthru
          _
      $region56: #{decoder_target.1} parent=5 // pred_fallthru
        _
      %p3131 = scmp.le.s32.totalorder 2, %s22
      // Predicated region
      $region116: #{decoder_target.1} parent=5 // pred_check
        %p3132 = pneg %p3131
      $region117: #{decoder_target.1} parent=5 // pred_check_branch
        %3134 = sbr.rel (%p3132) target = $region119
      $region118: #{decoder_target.1} parent=5 // pred_region
        %s3135 = ssub.s32 %s22, 2
        // Predicated region
        $region120: #{decoder_target.1} parent=118 // pred_check
          %p3136 = pneg %p250
        $region121: #{decoder_target.1} parent=118 // pred_check_branch
          %3138 = sbr.rel (%p3136) target = $region123
        $region122: #{decoder_target.1} parent=118 // pred_region
          %s3139 = sand.u32 %s235, 1
          %s3140 = sand.u32 %s235, 1
          %s3141 = smul.addr %s3140, 128
          %s3142 = scalar_lea.vmem [#allocation16], %s3141
        $region123: #{decoder_target.1} parent=118 // pred_fallthru
          _
      $region119: #{decoder_target.1} parent=5 // pred_fallthru
        _
    $region6: #{decoder_target.1} parent=1 // loop_footer
      %s26 = sadd.s32 1, %s22
    $region7: #{decoder_target.1} parent=1 // loop_footer_branch
      %21 = sbr.rel target = $region3
    $region8: #{decoder_target.1} parent=1 // loop_exit
      _
    %3143 = vsyncpa [#allocation3], 1
    %s3144 = scalar_lea.sflag [#allocation3], 1
    %3145 = vsyncpa %s3144, 1
    %3146 = vsyncpa [#allocation5], 1
    %3147 = vsyncpa [#allocation8], 1
    %3148 = vsyncpa [#allocation11], 1
    %3149 = vsyncpa [#allocation14], 1
    %s3150 = scalar_lea.sflag [#allocation14], 1
    %3151 = vsyncpa %s3150, 1

</llo_original>
